<compile_context>
chip_gen: v7x
topology: tpu7x:2x2x1
jax: 0.10.0
libtpu: 0.0.40
codegen_flags: <defaults>
</compile_context>

<pallas_src>
import functools
import math

import jax
import jax.numpy as jnp
import numpy as np
from jax.experimental import pallas as pl
from jax.experimental.pallas import tpu as pltpu


def _round_up(v, m):
    return (v + m - 1) // m * m


def _cdiv(a, b):
    return -(-a // b)


def _tpu_vmem_capacity():
    """Per-core VMEM bytes; conservative (v7x) fallback if query unavailable."""
    try:
        return int(pltpu.get_tpu_info().vmem_capacity_bytes)
    except Exception:
        return 64 * 1024 * 1024


def _pick_item_tile(num_items, max_tile):
    """Largest multiple of 128 that divides num_items and is <= max_tile."""
    m = num_items // 128
    for d in range(min(m, max(max_tile // 128, 1)), 0, -1):
        if m % d == 0:
            return 128 * d
    return 128


def _generator_t_kernel(x_ref, wenc_ref, benc_ref, wdec_ref, bdec_ref,
                        hs_ref, hd_ref, pred_ref,
                        acc_ref, hbf_ref, *, hidden_d, n_item_tiles):
    """Two-phase item sweep per batch tile.

    Phase 0 (t in [0, n_item_tiles)):   acc += x_tile @ W_enc_tile  (f32)
      last phase-0 step:                h = sigmoid(acc + b_enc); write hd/hs.
    Phase 1 (t in [n_item_tiles, 2n)):  pred_tile = h @ W_dec_tile + b_dec_tile
    """
    t = pl.program_id(1)
    is_enc = t < n_item_tiles

    @pl.when(t == 0)
    def _init():
        acc_ref[...] = jnp.zeros_like(acc_ref)

    @pl.when(is_enc)
    def _encode():
        acc_ref[...] += jnp.dot(x_ref[...], wenc_ref[...],
                                preferred_element_type=jnp.float32)

    @pl.when(t == n_item_tiles - 1)
    def _activate():
        h = jax.nn.sigmoid(acc_ref[...] + benc_ref[...])        # (TB, H) f32
        hbf_ref[...] = h.astype(hbf_ref.dtype)                  # bf16 for MXU
        # Lane-aligned slices (Hd multiple of 128) -> no relayout.
        hd_ref[...] = h[:, :hidden_d].astype(hd_ref.dtype)
        hs_ref[...] = h[:, hidden_d:].astype(hs_ref.dtype)

    @pl.when(jnp.logical_not(is_enc))
    def _decode():
        pred_ref[...] = (
            jnp.dot(hbf_ref[...], wdec_ref[...],
                    preferred_element_type=jnp.float32)
            + bdec_ref[...]).astype(pred_ref.dtype)


def generator_t_forward(data_t, params, *, hidden_d, pred_dtype=jnp.float32,
                        max_item_tile=None, max_batch_tile=None):
    """data_t: (B, 1, num_items_t). Returns (hidden_s, hidden_d, pred)."""
    x = jnp.squeeze(data_t, axis=1)                              # (B, I)
    B, I = x.shape
    wenc, benc = params["w_enc"], params["b_enc"]                # (I, H) bf16, (1, H) f32
    wdec, bdec = params["w_dec"], params["b_dec"]                # (H, I) bf16, (1, I) f32
    H = wenc.shape[1]
    Hd = hidden_d
    Hs = H - Hd

    # Clean lane layout requires 128-multiples; current config satisfies this.
    # TODO(synk): pad I/Hd/Hs to multiples of 128 for configs that are not.
    assert I % 128 == 0 and Hd % 128 == 0 and Hs % 128 == 0, (
        "num_items_t, hidden_size_gen_t_d and hidden_size_gen_t_s must be "
        "multiples of 128")

    # bf16 activations into the MXU (weights already bf16).
    x = x.astype(jnp.bfloat16)

    vmem_cap = _tpu_vmem_capacity()

    # Generation-aware batch-tile cap (v7x has 64 MiB/TC; v5e/v6e have 128 MiB),
    # then balance tiles so padding waste stays small.
    tb_cap = max_batch_tile if max_batch_tile is not None else (
        256 if vmem_cap < 100 * 1024 * 1024 else 512)
    B_pad = _round_up(max(B, 1), 8)
    n_btiles = _cdiv(B_pad, min(B_pad, tb_cap))
    TB = _round_up(_cdiv(B_pad, n_btiles), 8)
    B_pad = _round_up(B_pad, TB)
    nb = B_pad // TB
    if B_pad != B:
        x = jnp.pad(x, ((0, B_pad - B), (0, 0)))

    # Item tile (shared by encoder-K streaming and decoder-N streaming).
    TI = _pick_item_tile(I, max_item_tile if max_item_tile is not None else 512)
    nI = I // TI

    # Advisory cost estimate for the XLA scheduler (weights stream once per
    # batch tile in this design).
    flops = 4 * B_pad * I * H
    transcendentals = B_pad * H
    bytes_accessed = (B_pad * I * 2                              # bf16 input
                      + nb * (I * H * 2 + H * I * 2)             # bf16 weights
                      + H * 4 + nb * I * 4                       # f32 biases
                      + B_pad * H * 4                            # hidden outs
                      + B_pad * I * jnp.dtype(pred_dtype).itemsize)

    # Real per-buffer VMEM footprint: streamed tiles x2 (double-buffered),
    # single-buffered bias x1, outputs x2, scratch x1; margin for Mosaic
    # internals; capped at 90% of this generation's physical VMEM.
    footprint = (2 * TB * TI * 2          # x tile (bf16)
                 + 2 * TI * H * 2         # W_enc tile (bf16)
                 + 1 * H * 4              # b_enc (Buffered(1))
                 + 2 * H * TI * 2         # W_dec tile (bf16)
                 + 2 * TI * 4             # b_dec tile
                 + 2 * TB * Hs * 4        # hs out
                 + 2 * TB * Hd * 4        # hd out
                 + 2 * TB * TI * jnp.dtype(pred_dtype).itemsize  # pred tile
                 + TB * H * 4 + TB * H * 2)                      # acc + h_bf16 scratch
    vmem_limit = int(min(max(footprint + (4 << 20), 16 << 20),
                         int(0.9 * vmem_cap)))

    kernel = functools.partial(_generator_t_kernel,
                               hidden_d=Hd, n_item_tiles=nI)

    def build(single_buffer_bias):
        # b_enc is the only grid-invariant operand left; single-buffer it.
        if single_buffer_bias:
            benc_spec = pl.BlockSpec((1, H), lambda b, t: (0, 0),
                                     pipeline_mode=pl.Buffered(1))
        else:
            benc_spec = pl.BlockSpec((1, H), lambda b, t: (0, 0))
        return pl.pallas_call(
            kernel,
            out_shape=(
                jax.ShapeDtypeStruct((B_pad, Hs), jnp.float32),
                jax.ShapeDtypeStruct((B_pad, Hd), jnp.float32),
                jax.ShapeDtypeStruct((B_pad, I), pred_dtype),
            ),
            grid_spec=pltpu.PrefetchScalarGridSpec(
                num_scalar_prefetch=0,
                grid=(nb, 2 * nI),
                in_specs=[
                    # x: item tiles during encode; frozen on last tile during decode.
                    pl.BlockSpec((TB, TI),
                                 lambda b, t: (b, jnp.minimum(t, nI - 1))),
                    # W_enc: K-tiles during encode; frozen during decode.
                    pl.BlockSpec((TI, H),
                                 lambda b, t: (jnp.minimum(t, nI - 1), 0)),
                    benc_spec,
                    # W_dec: frozen during encode; N-tiles during decode.
                    pl.BlockSpec((H, TI),
                                 lambda b, t: (0, jnp.maximum(t - nI, 0))),
                    pl.BlockSpec((1, TI),
                                 lambda b, t: (0, jnp.maximum(t - nI, 0))),
                ],
                out_specs=[
                    pl.BlockSpec((TB, Hs), lambda b, t: (b, 0)),
                    pl.BlockSpec((TB, Hd), lambda b, t: (b, 0)),
                    pl.BlockSpec((TB, TI),
                                 lambda b, t: (b, jnp.maximum(t - nI, 0))),
                ],
                scratch_shapes=[
                    pltpu.VMEM((TB, H), jnp.float32),    # encoder accumulator
                    pltpu.VMEM((TB, H), jnp.bfloat16),   # activated hidden for MXU
                ],
            ),
            compiler_params=pltpu.CompilerParams(
                dimension_semantics=("parallel", "arbitrary"),
                vmem_limit_bytes=vmem_limit),
            cost_estimate=pl.CostEstimate(
                flops=int(flops),
                transcendentals=int(transcendentals),
                bytes_accessed=int(bytes_accessed)),
        )

    try:
        hs_out, hd_out, pred_out = build(True)(x, wenc, benc, wdec, bdec)
    except Exception:
        # Fallback if this jax build rejects pipeline_mode=pl.Buffered(1);
        # only costs one extra double-buffered (1, H) bias.
        hs_out, hd_out, pred_out = build(False)(x, wenc, benc, wdec, bdec)

    if B_pad != B:
        hs_out, hd_out, pred_out = hs_out[:B], hd_out[:B], pred_out[:B]
    return hs_out, hd_out, pred_out


def init_params(key, num_items_t, hidden_d, hidden_s):
    """nn.Linear-style init; encoder weights pre-fused as [Wd | Ws], bf16 weights."""
    k = jax.random.split(key, 4)
    H = hidden_d + hidden_s

    enc_bound = 1.0 / math.sqrt(num_items_t)     # fan_in = num_items_t for both encoders
    w_enc = jax.random.uniform(k[0], (num_items_t, H), jnp.float32,
                               -enc_bound, enc_bound)
    b_enc = jax.random.uniform(k[1], (1, H), jnp.float32, -enc_bound, enc_bound)

    dec_bound = 1.0 / math.sqrt(H)               # fan_in = Hd + Hs for the decoder
    w_dec = jax.random.uniform(k[2], (H, num_items_t), jnp.float32,
                               -dec_bound, dec_bound)
    b_dec = jax.random.uniform(k[3], (1, num_items_t), jnp.float32,
                               -dec_bound, dec_bound)

    return {
        "w_enc": w_enc.astype(jnp.bfloat16),
        "b_enc": b_enc,
        "w_dec": w_dec.astype(jnp.bfloat16),
        "b_dec": b_dec,
    }


def _reference(data_t, params, *, hidden_d):
    """Pure-JAX reference mirroring the kernel's dtype casts."""
    x = jnp.squeeze(data_t, axis=1).astype(jnp.bfloat16).astype(jnp.float32)
    w_enc = params["w_enc"].astype(jnp.float32)
    w_dec = params["w_dec"].astype(jnp.float32)
    h = jax.nn.sigmoid(x @ w_enc + params["b_enc"])
    hd = h[:, :hidden_d]
    hs = h[:, hidden_d:]
    h_bf = h.astype(jnp.bfloat16).astype(jnp.float32)
    pred = h_bf @ w_dec + params["b_dec"]
    return hs, hd, pred


if __name__ == "__main__":
    key = jax.random.PRNGKey(0)
    k_data, k_params, k_data2, k_params2 = jax.random.split(key, 4)

    # Test 1: toy shapes consistent with the module
    #   batch=8, num_items_t=256, hidden_size_gen_t_d=128, hidden_size_gen_t_s=128
    B, NUM_ITEMS_T, HD, HS = 8, 256, 128, 128
    data_t = (jax.random.uniform(k_data, (B, 1, NUM_ITEMS_T)) < 0.1).astype(jnp.float32)
    params = init_params(k_params, NUM_ITEMS_T, HD, HS)

    hs, hd, pred = generator_t_forward(data_t, params, hidden_d=HD)
    jax.block_until_ready((hs, hd, pred))

    hs_r, hd_r, pred_r = _reference(data_t, params, hidden_d=HD)
    np.testing.assert_allclose(np.asarray(hs), np.asarray(hs_r), rtol=1e-4, atol=1e-5)
    np.testing.assert_allclose(np.asarray(hd), np.asarray(hd_r), rtol=1e-4, atol=1e-5)
    np.testing.assert_allclose(np.asarray(pred), np.asarray(pred_r), rtol=1e-3, atol=1e-3)

    # Test 2: multi-tile path (2 batch tiles x 2 item tiles) to exercise the
    # phased encoder-K accumulation, decoder-N streaming, scratch re-init and
    # batch-padding slice-off.
    B2, I2, HD2, HS2 = 20, 512, 128, 256
    data2 = (jax.random.uniform(k_data2, (B2, 1, I2)) < 0.1).astype(jnp.float32)
    params2 = init_params(k_params2, I2, HD2, HS2)
    hs2, hd2, pred2 = generator_t_forward(data2, params2, hidden_d=HD2,
                                          max_item_tile=256, max_batch_tile=16)
    jax.block_until_ready((hs2, hd2, pred2))
    hs2_r, hd2_r, pred2_r = _reference(data2, params2, hidden_d=HD2)
    np.testing.assert_allclose(np.asarray(hs2), np.asarray(hs2_r), rtol=1e-3, atol=1e-3)
    np.testing.assert_allclose(np.asarray(hd2), np.asarray(hd2_r), rtol=1e-3, atol=1e-3)
    np.testing.assert_allclose(np.asarray(pred2), np.asarray(pred2_r), rtol=1e-3, atol=1e-3)

    print("KERNEL_OK")
</pallas_src>

<mosaic_0001>
module attributes {stable_mosaic.version = 11 : i64} {
  func.func @_generator_t_kernel(%arg0: i32, %arg1: i32, %arg2: memref<8x256xbf16, #tpu.memory_space<vmem>>, %arg3: memref<256x256xbf16, #tpu.memory_space<vmem>>, %arg4: memref<1x256xf32, #tpu.memory_space<vmem>>, %arg5: memref<256x256xbf16, #tpu.memory_space<vmem>>, %arg6: memref<1x256xf32, #tpu.memory_space<vmem>>, %arg7: memref<8x128xf32, #tpu.memory_space<vmem>>, %arg8: memref<8x128xf32, #tpu.memory_space<vmem>>, %arg9: memref<8x256xf32, #tpu.memory_space<vmem>>, %arg10: memref<8x256xf32, #tpu.memory_space<vmem>>, %arg11: memref<8x256xbf16, #tpu.memory_space<vmem>>) attributes {dimension_semantics = [#tpu.dimension_semantics<parallel>, #tpu.dimension_semantics<arbitrary>], iteration_bounds = array<i64: 1, 2>, scalar_prefetch = 0 : i64, scratch_operands = 2 : i64, tpu.core_type = #tpu.core_type<tc>, window_params = [{transform_indices = @transform_0, window_bounds = array<i64: 8, 256>}, {transform_indices = @transform_1, window_bounds = array<i64: 256, 256>}, {pipeline_mode = #tpu.pipeline_mode<synchronous>, transform_indices = @transform_2, window_bounds = array<i64: 1, 256>}, {transform_indices = @transform_3, window_bounds = array<i64: 256, 256>}, {transform_indices = @transform_4, window_bounds = array<i64: 1, 256>}, {transform_indices = @transform_5, window_bounds = array<i64: 8, 128>}, {transform_indices = @transform_6, window_bounds = array<i64: 8, 128>}, {transform_indices = @transform_7, window_bounds = array<i64: 8, 256>}]} {
    %c1_i32 = arith.constant 1 : i32
    %0 = arith.cmpi slt, %arg1, %c1_i32 : i32
    %c0_i32 = arith.constant 0 : i32
    %1 = arith.cmpi eq, %arg1, %c0_i32 : i32
    %2 = arith.extui %1 : i1 to i32
    %c0_i32_0 = arith.constant 0 : i32
    %3 = arith.cmpi ne, %2, %c0_i32_0 : i32
    scf.if %3 {
      %cst = arith.constant 0.000000e+00 : f32
      %12 = vector.broadcast %cst : f32 to vector<8x256xf32>
      %c0 = arith.constant 0 : index
      %c0_5 = arith.constant 0 : index
      %13 = vector.load %arg10[%c0, %c0_5] : memref<8x256xf32, #tpu.memory_space<vmem>>, vector<8x256xf32>
      tpu.vector_store %arg10[%c0, %c0_5], %12 {strides = array<i32>} : memref<8x256xf32, #tpu.memory_space<vmem>>, vector<8x256xf32>,
    } else {
    }
    %4 = arith.extui %0 : i1 to i32
    %c0_i32_1 = arith.constant 0 : i32
    %5 = arith.cmpi ne, %4, %c0_i32_1 : i32
    scf.if %5 {
      %c0 = arith.constant 0 : index
      %c0_5 = arith.constant 0 : index
      %12 = vector.load %arg10[%c0, %c0_5] : memref<8x256xf32, #tpu.memory_space<vmem>>, vector<8x256xf32>
      %c0_6 = arith.constant 0 : index
      %c0_7 = arith.constant 0 : index
      %13 = vector.load %arg2[%c0_6, %c0_7] : memref<8x256xbf16, #tpu.memory_space<vmem>>, vector<8x256xbf16>
      %c0_8 = arith.constant 0 : index
      %c0_9 = arith.constant 0 : index
      %14 = vector.load %arg3[%c0_8, %c0_9] : memref<256x256xbf16, #tpu.memory_space<vmem>>, vector<256x256xbf16>
      %cst = arith.constant dense<0.000000e+00> : vector<8x256xf32>
      %15 = tpu.matmul %13, %14, %cst {dimension_numbers = #tpu.dot_dimension_numbers<[1], [0], [0], [1], [0, 0, 1, 1], [], []>} : vector<8x256xbf16>, vector<256x256xbf16>, vector<8x256xf32> -> vector<8x256xf32>
      %16 = arith.addf %12, %15 : vector<8x256xf32>
      %c0_10 = arith.constant 0 : index
      %c0_11 = arith.constant 0 : index
      %17 = vector.load %arg10[%c0_10, %c0_11] : memref<8x256xf32, #tpu.memory_space<vmem>>, vector<8x256xf32>
      tpu.vector_store %arg10[%c0_10, %c0_11], %16 {strides = array<i32>} : memref<8x256xf32, #tpu.memory_space<vmem>>, vector<8x256xf32>,
    } else {
    }
    %c0_i32_2 = arith.constant 0 : i32
    %6 = arith.cmpi eq, %arg1, %c0_i32_2 : i32
    %7 = arith.extui %6 : i1 to i32
    %c0_i32_3 = arith.constant 0 : i32
    %8 = arith.cmpi ne, %7, %c0_i32_3 : i32
    scf.if %8 {
      %c0 = arith.constant 0 : index
      %c0_5 = arith.constant 0 : index
      %12 = vector.load %arg10[%c0, %c0_5] : memref<8x256xf32, #tpu.memory_space<vmem>>, vector<8x256xf32>
      %c0_6 = arith.constant 0 : index
      %c0_7 = arith.constant 0 : index
      %13 = vector.load %arg4[%c0_6, %c0_7] : memref<1x256xf32, #tpu.memory_space<vmem>>, vector<1x256xf32>
      %14 = vector.broadcast %13 : vector<1x256xf32> to vector<8x256xf32>
      %15 = arith.addf %12, %14 : vector<8x256xf32>
      %16 = arith.negf %15 : vector<8x256xf32>
      %17 = math.exp %16 : vector<8x256xf32>
      %cst = arith.constant 1.000000e+00 : f32
      %18 = vector.broadcast %cst : f32 to vector<8x256xf32>
      %19 = arith.addf %18, %17 : vector<8x256xf32>
      %20 = arith.divf %18, %19 : vector<8x256xf32>
      %21 = arith.truncf %20 : vector<8x256xf32> to vector<8x256xbf16>
      %c0_8 = arith.constant 0 : index
      %c0_9 = arith.constant 0 : index
      %22 = vector.load %arg11[%c0_8, %c0_9] : memref<8x256xbf16, #tpu.memory_space<vmem>>, vector<8x256xbf16>
      tpu.vector_store %arg11[%c0_8, %c0_9], %21 {strides = array<i32>} : memref<8x256xbf16, #tpu.memory_space<vmem>>, vector<8x256xbf16>,
      %23 = vector.extract_strided_slice %20 {offsets = [0, 0], sizes = [8, 128], strides = [1, 1]} : vector<8x256xf32> to vector<8x128xf32>
      %c0_10 = arith.constant 0 : index
      %c0_11 = arith.constant 0 : index
      %24 = vector.load %arg8[%c0_10, %c0_11] : memref<8x128xf32, #tpu.memory_space<vmem>>, vector<8x128xf32>
      tpu.vector_store %arg8[%c0_10, %c0_11], %23 {strides = array<i32>} : memref<8x128xf32, #tpu.memory_space<vmem>>, vector<8x128xf32>,
      %25 = vector.extract_strided_slice %20 {offsets = [0, 128], sizes = [8, 128], strides = [1, 1]} : vector<8x256xf32> to vector<8x128xf32>
      %c0_12 = arith.constant 0 : index
      %c0_13 = arith.constant 0 : index
      %26 = vector.load %arg7[%c0_12, %c0_13] : memref<8x128xf32, #tpu.memory_space<vmem>>, vector<8x128xf32>
      tpu.vector_store %arg7[%c0_12, %c0_13], %25 {strides = array<i32>} : memref<8x128xf32, #tpu.memory_space<vmem>>, vector<8x128xf32>,
    } else {
    }
    %true = arith.constant true
    %9 = arith.xori %0, %true : i1
    %10 = arith.extui %9 : i1 to i32
    %c0_i32_4 = arith.constant 0 : i32
    %11 = arith.cmpi ne, %10, %c0_i32_4 : i32
    scf.if %11 {
      %c0 = arith.constant 0 : index
      %c0_5 = arith.constant 0 : index
      %12 = vector.load %arg11[%c0, %c0_5] : memref<8x256xbf16, #tpu.memory_space<vmem>>, vector<8x256xbf16>
      %c0_6 = arith.constant 0 : index
      %c0_7 = arith.constant 0 : index
      %13 = vector.load %arg5[%c0_6, %c0_7] : memref<256x256xbf16, #tpu.memory_space<vmem>>, vector<256x256xbf16>
      %cst = arith.constant dense<0.000000e+00> : vector<8x256xf32>
      %14 = tpu.matmul %12, %13, %cst {dimension_numbers = #tpu.dot_dimension_numbers<[1], [0], [0], [1], [0, 0, 1, 1], [], []>} : vector<8x256xbf16>, vector<256x256xbf16>, vector<8x256xf32> -> vector<8x256xf32>
      %c0_8 = arith.constant 0 : index
      %c0_9 = arith.constant 0 : index
      %15 = vector.load %arg6[%c0_8, %c0_9] : memref<1x256xf32, #tpu.memory_space<vmem>>, vector<1x256xf32>
      %16 = vector.broadcast %15 : vector<1x256xf32> to vector<8x256xf32>
      %17 = arith.addf %14, %16 : vector<8x256xf32>
      %c0_10 = arith.constant 0 : index
      %c0_11 = arith.constant 0 : index
      %18 = vector.load %arg9[%c0_10, %c0_11] : memref<8x256xf32, #tpu.memory_space<vmem>>, vector<8x256xf32>
      tpu.vector_store %arg9[%c0_10, %c0_11], %17 {strides = array<i32>} : memref<8x256xf32, #tpu.memory_space<vmem>>, vector<8x256xf32>,
    } else {
    }
    return
  }
  func.func @transform_0(%arg0: i32, %arg1: i32) -> (i32, i32) {
    %c0_i32 = arith.constant 0 : i32
    %0 = arith.minsi %arg1, %c0_i32 : i32
    %c0_i32_0 = arith.constant 0 : i32
    return %arg0, %0 : i32, i32
  }
  func.func @transform_1(%arg0: i32, %arg1: i32) -> (i32, i32) {
    %c0_i32 = arith.constant 0 : i32
    %0 = arith.minsi %arg1, %c0_i32 : i32
    %c0_i32_0 = arith.constant 0 : i32
    %c0_i32_1 = arith.constant 0 : i32
    return %0, %c0_i32_0 : i32, i32
  }
  func.func @transform_2(%arg0: i32, %arg1: i32) -> (i32, i32) {
    %c0_i32 = arith.constant 0 : i32
    %c0_i32_0 = arith.constant 0 : i32
    %c0_i32_1 = arith.constant 0 : i32
    return %c0_i32, %c0_i32_0 : i32, i32
  }
  func.func @transform_3(%arg0: i32, %arg1: i32) -> (i32, i32) {
    %c1_i32 = arith.constant 1 : i32
    %0 = arith.subi %arg1, %c1_i32 : i32
    %c0_i32 = arith.constant 0 : i32
    %1 = arith.maxsi %0, %c0_i32 : i32
    %c0_i32_0 = arith.constant 0 : i32
    %c0_i32_1 = arith.constant 0 : i32
    return %c0_i32_0, %1 : i32, i32
  }
  func.func @transform_4(%arg0: i32, %arg1: i32) -> (i32, i32) {
    %c1_i32 = arith.constant 1 : i32
    %0 = arith.subi %arg1, %c1_i32 : i32
    %c0_i32 = arith.constant 0 : i32
    %1 = arith.maxsi %0, %c0_i32 : i32
    %c0_i32_0 = arith.constant 0 : i32
    %c0_i32_1 = arith.constant 0 : i32
    return %c0_i32_0, %1 : i32, i32
  }
  func.func @transform_5(%arg0: i32, %arg1: i32) -> (i32, i32) {
    %c0_i32 = arith.constant 0 : i32
    %c0_i32_0 = arith.constant 0 : i32
    return %arg0, %c0_i32 : i32, i32
  }
  func.func @transform_6(%arg0: i32, %arg1: i32) -> (i32, i32) {
    %c0_i32 = arith.constant 0 : i32
    %c0_i32_0 = arith.constant 0 : i32
    return %arg0, %c0_i32 : i32, i32
  }
  func.func @transform_7(%arg0: i32, %arg1: i32) -> (i32, i32) {
    %c1_i32 = arith.constant 1 : i32
    %0 = arith.subi %arg1, %c1_i32 : i32
    %c0_i32 = arith.constant 0 : i32
    %1 = arith.maxsi %0, %c0_i32 : i32
    %c0_i32_0 = arith.constant 0 : i32
    return %arg0, %1 : i32, i32
  }
}

module attributes {stable_mosaic.version = 11 : i64} {
  func.func @_generator_t_kernel(%arg0: i32, %arg1: i32, %arg2: memref<8x256xbf16, #tpu.memory_space<vmem>>, %arg3: memref<256x256xbf16, #tpu.memory_space<vmem>>, %arg4: memref<1x256xf32, #tpu.memory_space<vmem>>, %arg5: memref<256x256xbf16, #tpu.memory_space<vmem>>, %arg6: memref<1x256xf32, #tpu.memory_space<vmem>>, %arg7: memref<8x128xf32, #tpu.memory_space<vmem>>, %arg8: memref<8x128xf32, #tpu.memory_space<vmem>>, %arg9: memref<8x256xf32, #tpu.memory_space<vmem>>, %arg10: memref<8x256xf32, #tpu.memory_space<vmem>>, %arg11: memref<8x256xbf16, #tpu.memory_space<vmem>>) attributes {dimension_semantics = [#tpu.dimension_semantics<parallel>, #tpu.dimension_semantics<arbitrary>], iteration_bounds = array<i64: 1, 2>, scalar_prefetch = 0 : i64, scratch_operands = 2 : i64, tpu.core_type = #tpu.core_type<tc>, window_params = [{transform_indices = @transform_0, window_bounds = array<i64: 8, 256>}, {transform_indices = @transform_1, window_bounds = array<i64: 256, 256>}, {pipeline_mode = #tpu.pipeline_mode<synchronous>, transform_indices = @transform_2, window_bounds = array<i64: 1, 256>}, {transform_indices = @transform_3, window_bounds = array<i64: 256, 256>}, {transform_indices = @transform_4, window_bounds = array<i64: 1, 256>}, {transform_indices = @transform_5, window_bounds = array<i64: 8, 128>}, {transform_indices = @transform_6, window_bounds = array<i64: 8, 128>}, {transform_indices = @transform_7, window_bounds = array<i64: 8, 256>}]} {
    %c1_i32 = arith.constant 1 : i32
    %0 = arith.cmpi slt, %arg1, %c1_i32 : i32
    %c0_i32 = arith.constant 0 : i32
    %1 = arith.cmpi eq, %arg1, %c0_i32 : i32
    %2 = arith.extui %1 : i1 to i32
    %c0_i32_0 = arith.constant 0 : i32
    %3 = arith.cmpi ne, %2, %c0_i32_0 : i32
    scf.if %3 {
      %cst = arith.constant 0.000000e+00 : f32
      %12 = vector.broadcast %cst : f32 to vector<8x256xf32>
      %c0 = arith.constant 0 : index
      %c0_5 = arith.constant 0 : index
      %13 = vector.load %arg10[%c0, %c0_5] : memref<8x256xf32, #tpu.memory_space<vmem>>, vector<8x256xf32>
      tpu.vector_store %arg10[%c0, %c0_5], %12 {strides = array<i32>} : memref<8x256xf32, #tpu.memory_space<vmem>>, vector<8x256xf32>,
    } else {
    }
    %4 = arith.extui %0 : i1 to i32
    %c0_i32_1 = arith.constant 0 : i32
    %5 = arith.cmpi ne, %4, %c0_i32_1 : i32
    scf.if %5 {
      %c0 = arith.constant 0 : index
      %c0_5 = arith.constant 0 : index
      %12 = vector.load %arg10[%c0, %c0_5] : memref<8x256xf32, #tpu.memory_space<vmem>>, vector<8x256xf32>
      %c0_6 = arith.constant 0 : index
      %c0_7 = arith.constant 0 : index
      %13 = vector.load %arg2[%c0_6, %c0_7] : memref<8x256xbf16, #tpu.memory_space<vmem>>, vector<8x256xbf16>
      %c0_8 = arith.constant 0 : index
      %c0_9 = arith.constant 0 : index
      %14 = vector.load %arg3[%c0_8, %c0_9] : memref<256x256xbf16, #tpu.memory_space<vmem>>, vector<256x256xbf16>
      %cst = arith.constant dense<0.000000e+00> : vector<8x256xf32>
      %15 = tpu.matmul %13, %14, %cst {dimension_numbers = #tpu.dot_dimension_numbers<[1], [0], [0], [1], [0, 0, 1, 1], [], []>} : vector<8x256xbf16>, vector<256x256xbf16>, vector<8x256xf32> -> vector<8x256xf32>
      %16 = arith.addf %12, %15 : vector<8x256xf32>
      %c0_10 = arith.constant 0 : index
      %c0_11 = arith.constant 0 : index
      %17 = vector.load %arg10[%c0_10, %c0_11] : memref<8x256xf32, #tpu.memory_space<vmem>>, vector<8x256xf32>
      tpu.vector_store %arg10[%c0_10, %c0_11], %16 {strides = array<i32>} : memref<8x256xf32, #tpu.memory_space<vmem>>, vector<8x256xf32>,
    } else {
    }
    %c0_i32_2 = arith.constant 0 : i32
    %6 = arith.cmpi eq, %arg1, %c0_i32_2 : i32
    %7 = arith.extui %6 : i1 to i32
    %c0_i32_3 = arith.constant 0 : i32
    %8 = arith.cmpi ne, %7, %c0_i32_3 : i32
    scf.if %8 {
      %c0 = arith.constant 0 : index
      %c0_5 = arith.constant 0 : index
      %12 = vector.load %arg10[%c0, %c0_5] : memref<8x256xf32, #tpu.memory_space<vmem>>, vector<8x256xf32>
      %c0_6 = arith.constant 0 : index
      %c0_7 = arith.constant 0 : index
      %13 = vector.load %arg4[%c0_6, %c0_7] : memref<1x256xf32, #tpu.memory_space<vmem>>, vector<1x256xf32>
      %14 = vector.broadcast %13 : vector<1x256xf32> to vector<8x256xf32>
      %15 = arith.addf %12, %14 : vector<8x256xf32>
      %16 = arith.negf %15 : vector<8x256xf32>
      %17 = math.exp %16 : vector<8x256xf32>
      %cst = arith.constant 1.000000e+00 : f32
      %18 = vector.broadcast %cst : f32 to vector<8x256xf32>
      %19 = arith.addf %18, %17 : vector<8x256xf32>
      %20 = arith.divf %18, %19 : vector<8x256xf32>
      %21 = arith.truncf %20 : vector<8x256xf32> to vector<8x256xbf16>
      %c0_8 = arith.constant 0 : index
      %c0_9 = arith.constant 0 : index
      %22 = vector.load %arg11[%c0_8, %c0_9] : memref<8x256xbf16, #tpu.memory_space<vmem>>, vector<8x256xbf16>
      tpu.vector_store %arg11[%c0_8, %c0_9], %21 {strides = array<i32>} : memref<8x256xbf16, #tpu.memory_space<vmem>>, vector<8x256xbf16>,
      %23 = vector.extract_strided_slice %20 {offsets = [0, 0], sizes = [8, 128], strides = [1, 1]} : vector<8x256xf32> to vector<8x128xf32>
      %c0_10 = arith.constant 0 : index
      %c0_11 = arith.constant 0 : index
      %24 = vector.load %arg8[%c0_10, %c0_11] : memref<8x128xf32, #tpu.memory_space<vmem>>, vector<8x128xf32>
      tpu.vector_store %arg8[%c0_10, %c0_11], %23 {strides = array<i32>} : memref<8x128xf32, #tpu.memory_space<vmem>>, vector<8x128xf32>,
      %25 = vector.extract_strided_slice %20 {offsets = [0, 128], sizes = [8, 128], strides = [1, 1]} : vector<8x256xf32> to vector<8x128xf32>
      %c0_12 = arith.constant 0 : index
      %c0_13 = arith.constant 0 : index
      %26 = vector.load %arg7[%c0_12, %c0_13] : memref<8x128xf32, #tpu.memory_space<vmem>>, vector<8x128xf32>
      tpu.vector_store %arg7[%c0_12, %c0_13], %25 {strides = array<i32>} : memref<8x128xf32, #tpu.memory_space<vmem>>, vector<8x128xf32>,
    } else {
    }
    %true = arith.constant true
    %9 = arith.xori %0, %true : i1
    %10 = arith.extui %9 : i1 to i32
    %c0_i32_4 = arith.constant 0 : i32
    %11 = arith.cmpi ne, %10, %c0_i32_4 : i32
    scf.if %11 {
      %c0 = arith.constant 0 : index
      %c0_5 = arith.constant 0 : index
      %12 = vector.load %arg11[%c0, %c0_5] : memref<8x256xbf16, #tpu.memory_space<vmem>>, vector<8x256xbf16>
      %c0_6 = arith.constant 0 : index
      %c0_7 = arith.constant 0 : index
      %13 = vector.load %arg5[%c0_6, %c0_7] : memref<256x256xbf16, #tpu.memory_space<vmem>>, vector<256x256xbf16>
      %cst = arith.constant dense<0.000000e+00> : vector<8x256xf32>
      %14 = tpu.matmul %12, %13, %cst {dimension_numbers = #tpu.dot_dimension_numbers<[1], [0], [0], [1], [0, 0, 1, 1], [], []>} : vector<8x256xbf16>, vector<256x256xbf16>, vector<8x256xf32> -> vector<8x256xf32>
      %c0_8 = arith.constant 0 : index
      %c0_9 = arith.constant 0 : index
      %15 = vector.load %arg6[%c0_8, %c0_9] : memref<1x256xf32, #tpu.memory_space<vmem>>, vector<1x256xf32>
      %16 = vector.broadcast %15 : vector<1x256xf32> to vector<8x256xf32>
      %17 = arith.addf %14, %16 : vector<8x256xf32>
      %c0_10 = arith.constant 0 : index
      %c0_11 = arith.constant 0 : index
      %18 = vector.load %arg9[%c0_10, %c0_11] : memref<8x256xf32, #tpu.memory_space<vmem>>, vector<8x256xf32>
      tpu.vector_store %arg9[%c0_10, %c0_11], %17 {strides = array<i32>} : memref<8x256xf32, #tpu.memory_space<vmem>>, vector<8x256xf32>,
    } else {
    }
    return
  }
  func.func @transform_0(%arg0: i32, %arg1: i32) -> (i32, i32) {
    %c0_i32 = arith.constant 0 : i32
    %0 = arith.minsi %arg1, %c0_i32 : i32
    %c0_i32_0 = arith.constant 0 : i32
    return %arg0, %0 : i32, i32
  }
  func.func @transform_1(%arg0: i32, %arg1: i32) -> (i32, i32) {
    %c0_i32 = arith.constant 0 : i32
    %0 = arith.minsi %arg1, %c0_i32 : i32
    %c0_i32_0 = arith.constant 0 : i32
    %c0_i32_1 = arith.constant 0 : i32
    return %0, %c0_i32_0 : i32, i32
  }
  func.func @transform_2(%arg0: i32, %arg1: i32) -> (i32, i32) {
    %c0_i32 = arith.constant 0 : i32
    %c0_i32_0 = arith.constant 0 : i32
    %c0_i32_1 = arith.constant 0 : i32
    return %c0_i32, %c0_i32_0 : i32, i32
  }
  func.func @transform_3(%arg0: i32, %arg1: i32) -> (i32, i32) {
    %c1_i32 = arith.constant 1 : i32
    %0 = arith.subi %arg1, %c1_i32 : i32
    %c0_i32 = arith.constant 0 : i32
    %1 = arith.maxsi %0, %c0_i32 : i32
    %c0_i32_0 = arith.constant 0 : i32
    %c0_i32_1 = arith.constant 0 : i32
    return %c0_i32_0, %1 : i32, i32
  }
  func.func @transform_4(%arg0: i32, %arg1: i32) -> (i32, i32) {
    %c1_i32 = arith.constant 1 : i32
    %0 = arith.subi %arg1, %c1_i32 : i32
    %c0_i32 = arith.constant 0 : i32
    %1 = arith.maxsi %0, %c0_i32 : i32
    %c0_i32_0 = arith.constant 0 : i32
    %c0_i32_1 = arith.constant 0 : i32
    return %c0_i32_0, %1 : i32, i32
  }
  func.func @transform_5(%arg0: i32, %arg1: i32) -> (i32, i32) {
    %c0_i32 = arith.constant 0 : i32
    %c0_i32_0 = arith.constant 0 : i32
    return %arg0, %c0_i32 : i32, i32
  }
  func.func @transform_6(%arg0: i32, %arg1: i32) -> (i32, i32) {
    %c0_i32 = arith.constant 0 : i32
    %c0_i32_0 = arith.constant 0 : i32
    return %arg0, %c0_i32 : i32, i32
  }
  func.func @transform_7(%arg0: i32, %arg1: i32) -> (i32, i32) {
    %c1_i32 = arith.constant 1 : i32
    %0 = arith.subi %arg1, %c1_i32 : i32
    %c0_i32 = arith.constant 0 : i32
    %1 = arith.maxsi %0, %c0_i32 : i32
    %c0_i32_0 = arith.constant 0 : i32
    return %arg0, %1 : i32, i32
  }
}

</mosaic_0001>

<llo_original>
// kernel: tpu_custom_call.1
$region0: #{tpu_custom_call.1}
  #allocation0 [shape = 'u32[]', space=smem, size = 0x4, offset = 0x4, fixed_abs, tag = 'smem constant byte address 0x4 - core index']
  #allocation1 [shape = 'u32[144,128]{1,0:T(1,128)}', space=vmem, size = 0x12000, scoped, tag = 'internal scratch']
  #allocation2 [shape = 'f32[8,256]{1,0:T(8,128)}', space=vmem, size = 0x2000, scoped, tag = 'scratch operand']
  #allocation3 [shape = 'bf16[8,256]{1,0:T(8,128)(2,1)}', space=vmem, size = 0x1000, scoped, tag = 'scratch operand']
  %s0 = inlined_call_operand.hbm [shape: bf16[8,256], index: 0, kind: input, shape index: {}]
  %s1 = inlined_call_operand.hbm [shape: bf16[256,256], index: 1, kind: input, shape index: {}]
  %s2 = inlined_call_operand.vmem [shape: f32[1,256], index: 2, kind: input, shape index: {}]
  %s3 = inlined_call_operand.hbm [shape: bf16[256,256], index: 3, kind: input, shape index: {}]
  %s4 = inlined_call_operand.vmem [shape: f32[1,256], index: 4, kind: input, shape index: {}]
  %s5 = inlined_call_operand.hbm [shape: f32[8,128], index: 5, kind: output, shape index: {0}]
  %s6 = inlined_call_operand.hbm [shape: f32[8,128], index: 6, kind: output, shape index: {1}]
  %s7 = inlined_call_operand.hbm [shape: f32[8,256], index: 7, kind: output, shape index: {2}]
  %8 = xla_tuple %s5, %s6, %s7
  %s9 = sld [smem:[#allocation0]]
  $region97: #{tpu_custom_call.1} parent=0
    _
  %s11 = ssub.s32 1, %s9
  %s12 = scalar_select 0, %s11, %s9
  $region1: #{tpu_custom_call.1} parent=0
    #allocation4 [shape = 'u8[8192]{0}', space=vmem, size = 0x2000, scoped, tag = 'input window, operand 0']
    #allocation5 [shape = 's32[2]{0}', space=sflag, size = 0x8, scoped, tag = 'scoped memory for tpu_custom_call.1']
    #allocation6 [shape = 's32[2]{0}', space=sflag, size = 0x8, scoped, tag = 'scoped memory for tpu_custom_call.1']
    #allocation7 [shape = 'u8[262144]{0}', space=vmem, size = 0x40000, scoped, tag = 'input window, operand 1']
    #allocation8 [shape = 's32[2]{0}', space=sflag, size = 0x8, scoped, tag = 'scoped memory for tpu_custom_call.1']
    #allocation9 [shape = 'u8[262144]{0}', space=vmem, size = 0x40000, scoped, tag = 'input window, operand 3']
    #allocation10 [shape = 'u8[4096]{0}', space=vmem, size = 0x1000, scoped, tag = 'output window, operand 0, single buffered']
    #allocation11 [shape = 'u8[4096]{0}', space=vmem, size = 0x1000, scoped, tag = 'output window, operand 1, single buffered']
    #allocation12 [shape = 's32[1]{0}', space=sflag, size = 0x4, scoped, tag = 'scoped memory for tpu_custom_call.1']
    #allocation13 [shape = 'u8[16384]{0}', space=vmem, size = 0x4000, scoped, tag = 'output window, operand 2']
    %13 = vsyncpa [#allocation5], 0
    %s14 = scalar_lea.sflag [#allocation5], 1
    %15 = vsyncpa %s14, 0
    %16 = vsyncpa [#allocation8], 0
    %s17 = scalar_lea.sflag [#allocation8], 1
    %18 = vsyncpa %s17, 0
    %19 = vsyncpa [#allocation6], 0
    %20 = vsyncpa [#allocation12], 0
    loop: start=0, step=1, limit=4
    $region2: #{tpu_custom_call.1} parent=1 // loop_pre_header
      _
    $region3: #{tpu_custom_call.1} parent=1 // loop_header
      %s22 = sphi 0, %s26
      %p23 = scmp.ge.s32.totalorder %s22, 4
      %s29 = sphi 0, %s41
      %s30 = sphi 0, %s37
      %s31 = sphi 0, %s29
      %s32 = sphi 0, %s30
      %s33 = sphi 0, %s31
      %s34 = sphi 0, %s32
      %s50 = sphi 0, %s52
      %s53 = sphi 0, %s50
      %s54 = sphi 0, %s53
      %s70 = sphi 0, %s54
      %s80 = sphi 0, %s82
      %s83 = sphi 0, %s80
      %s84 = sphi 0, %s83
      %s100 = sphi 0, %s84
      %s104 = sphi 0, %s104
      %s106 = sphi 0, %s104
      %s107 = sphi 0, %s106
      %s121 = sphi 0, %s107
      %s133 = sphi 0, %s135
      %s136 = sphi 0, %s133
      %s137 = sphi 0, %s136
      %s153 = sphi 0, %s137
      %s165 = sphi 0, %s167
      %s168 = sphi 0, %s165
      %s169 = sphi 0, %s168
      %s185 = sphi 0, %s169
      %s191 = sphi 0, %s193
      %s194 = sphi 0, %s191
      %s195 = sphi 0, %s194
      %s211 = sphi 0, %s195
      %s217 = sphi 0, %s219
      %s220 = sphi 0, %s217
      %s221 = sphi 0, %s220
      %s237 = sphi 0, %s221
      %s251 = sphi 0, %s253
      %s254 = sphi 0, %s251
      %s255 = sphi 0, %s254
      %s271 = sphi 0, %s255
    $region4: #{tpu_custom_call.1} parent=1 // loop_header_branch
      %25 = sbr.rel (%p23) target = $region8
    $region5: #{tpu_custom_call.1} parent=1 // loop_body
      %s27 = ssub.s32 %s22, 1
      %s28 = ssub.s32 %s22, 2
      %s35 = sadd.s32 1, %s30
      %p36 = scmp.ge.s32.totalorder %s35, 2
      %s37 = scalar_select %p36, 0, %s35
      %s38 = sadd.s32 1, %s29
      %s39 = scalar_select %p36, %s38, %s29
      %p40 = scmp.ge.s32.totalorder %s39, 1
      %s41 = scalar_select %p40, 0, %s39
      %p42 = scmp.lt.s32.totalorder %s30, 0
      %s43 = scalar_select %p42, %s30, 0
      %p44 = scmp.lt.s32.totalorder %s37, 0
      %s45 = scalar_select %p44, %s37, 0
      %s46 = ssub.s32 %s29, %s41
      %s47 = ssub.s32 %s43, %s45
      %s48 = sor.u32 %s46, %s47
      %p49 = scmp.eq.s32.totalorder %s48, 0
      %s51 = sadd.s32 %s50, 1
      %s52 = scalar_select %p49, %s50, %s51
      %p55 = pneg %p49
      %p56 = scmp.eq.s32.totalorder %s22, 1
      %p57 = por %p55, %p56
      %p58 = scmp.ne.s32.totalorder %s50, %s53
      %p59 = scmp.eq.s32.totalorder %s22, 0
      %p60 = por %p58, %p59
      %p61 = scmp.ne.s32.totalorder %s50, %s53
      %p62 = scmp.eq.s32.totalorder %s27, 1
      %p63 = por %p61, %p62
      %p64 = scmp.ne.s32.totalorder %s53, %s54
      %p65 = scmp.eq.s32.totalorder %s27, 0
      %p66 = por %p64, %p65
      %p67 = scmp.ne.s32.totalorder %s53, %s54
      %p68 = scmp.eq.s32.totalorder %s28, 1
      %p69 = por %p67, %p68
      %p71 = scmp.ne.s32.totalorder %s54, %s70
      %p72 = scmp.eq.s32.totalorder %s28, 0
      %p73 = por %p71, %p72
      %p74 = scmp.lt.s32.totalorder %s30, 0
      %s75 = scalar_select %p74, %s30, 0
      %p76 = scmp.lt.s32.totalorder %s37, 0
      %s77 = scalar_select %p76, %s37, 0
      %s78 = ssub.s32 %s75, %s77
      %p79 = scmp.eq.s32.totalorder %s78, 0
      %s81 = sadd.s32 %s80, 1
      %s82 = scalar_select %p79, %s80, %s81
      %p85 = pneg %p79
      %p86 = scmp.eq.s32.totalorder %s22, 1
      %p87 = por %p85, %p86
      %p88 = scmp.ne.s32.totalorder %s80, %s83
      %p89 = scmp.eq.s32.totalorder %s22, 0
      %p90 = por %p88, %p89
      %p91 = scmp.ne.s32.totalorder %s80, %s83
      %p92 = scmp.eq.s32.totalorder %s27, 1
      %p93 = por %p91, %p92
      %p94 = scmp.ne.s32.totalorder %s83, %s84
      %p95 = scmp.eq.s32.totalorder %s27, 0
      %p96 = por %p94, %p95
      %p97 = scmp.ne.s32.totalorder %s83, %s84
      %p98 = scmp.eq.s32.totalorder %s28, 1
      %p99 = por %p97, %p98
      %p101 = scmp.ne.s32.totalorder %s84, %s100
      %p102 = scmp.eq.s32.totalorder %s28, 0
      %p103 = por %p101, %p102
      %s105 = sadd.s32 %s104, 1
      %p108 = scmp.eq.s32.totalorder %s22, 1
      %p109 = scmp.ne.s32.totalorder %s104, %s106
      %p110 = scmp.eq.s32.totalorder %s22, 0
      %p111 = por %p109, %p110
      %p112 = scmp.ne.s32.totalorder %s104, %s106
      %p113 = scmp.eq.s32.totalorder %s27, 1
      %p114 = por %p112, %p113
      %p115 = scmp.ne.s32.totalorder %s106, %s107
      %p116 = scmp.eq.s32.totalorder %s27, 0
      %p117 = por %p115, %p116
      %p118 = scmp.ne.s32.totalorder %s106, %s107
      %p119 = scmp.eq.s32.totalorder %s28, 1
      %p120 = por %p118, %p119
      %p122 = scmp.ne.s32.totalorder %s107, %s121
      %p123 = scmp.eq.s32.totalorder %s28, 0
      %p124 = por %p122, %p123
      %s125 = ssub.s32 %s30, 1
      %p126 = scmp.gt.s32.totalorder %s125, 0
      %s127 = scalar_select %p126, %s125, 0
      %s128 = ssub.s32 %s37, 1
      %p129 = scmp.gt.s32.totalorder %s128, 0
      %s130 = scalar_select %p129, %s128, 0
      %s131 = ssub.s32 %s127, %s130
      %p132 = scmp.eq.s32.totalorder %s131, 0
      %s134 = sadd.s32 %s133, 1
      %s135 = scalar_select %p132, %s133, %s134
      %p138 = pneg %p132
      %p139 = scmp.eq.s32.totalorder %s22, 1
      %p140 = por %p138, %p139
      %p141 = scmp.ne.s32.totalorder %s133, %s136
      %p142 = scmp.eq.s32.totalorder %s22, 0
      %p143 = por %p141, %p142
      %p144 = scmp.ne.s32.totalorder %s133, %s136
      %p145 = scmp.eq.s32.totalorder %s27, 1
      %p146 = por %p144, %p145
      %p147 = scmp.ne.s32.totalorder %s136, %s137
      %p148 = scmp.eq.s32.totalorder %s27, 0
      %p149 = por %p147, %p148
      %p150 = scmp.ne.s32.totalorder %s136, %s137
      %p151 = scmp.eq.s32.totalorder %s28, 1
      %p152 = por %p150, %p151
      %p154 = scmp.ne.s32.totalorder %s137, %s153
      %p155 = scmp.eq.s32.totalorder %s28, 0
      %p156 = por %p154, %p155
      %s157 = ssub.s32 %s30, 1
      %p158 = scmp.gt.s32.totalorder %s157, 0
      %s159 = scalar_select %p158, %s157, 0
      %s160 = ssub.s32 %s37, 1
      %p161 = scmp.gt.s32.totalorder %s160, 0
      %s162 = scalar_select %p161, %s160, 0
      %s163 = ssub.s32 %s159, %s162
      %p164 = scmp.eq.s32.totalorder %s163, 0
      %s166 = sadd.s32 %s165, 1
      %s167 = scalar_select %p164, %s165, %s166
      %p170 = pneg %p164
      %p171 = scmp.eq.s32.totalorder %s22, 1
      %p172 = por %p170, %p171
      %p173 = scmp.ne.s32.totalorder %s165, %s168
      %p174 = scmp.eq.s32.totalorder %s22, 0
      %p175 = por %p173, %p174
      %p176 = scmp.ne.s32.totalorder %s165, %s168
      %p177 = scmp.eq.s32.totalorder %s27, 1
      %p178 = por %p176, %p177
      %p179 = scmp.ne.s32.totalorder %s168, %s169
      %p180 = scmp.eq.s32.totalorder %s27, 0
      %p181 = por %p179, %p180
      %p182 = scmp.ne.s32.totalorder %s168, %s169
      %p183 = scmp.eq.s32.totalorder %s28, 1
      %p184 = por %p182, %p183
      %p186 = scmp.ne.s32.totalorder %s169, %s185
      %p187 = scmp.eq.s32.totalorder %s28, 0
      %p188 = por %p186, %p187
      %s189 = ssub.s32 %s29, %s41
      %p190 = scmp.eq.s32.totalorder %s189, 0
      %s192 = sadd.s32 %s191, 1
      %s193 = scalar_select %p190, %s191, %s192
      %p196 = pneg %p190
      %p197 = scmp.eq.s32.totalorder %s22, 1
      %p198 = por %p196, %p197
      %p199 = scmp.ne.s32.totalorder %s191, %s194
      %p200 = scmp.eq.s32.totalorder %s22, 0
      %p201 = por %p199, %p200
      %p202 = scmp.ne.s32.totalorder %s191, %s194
      %p203 = scmp.eq.s32.totalorder %s27, 1
      %p204 = por %p202, %p203
      %p205 = scmp.ne.s32.totalorder %s194, %s195
      %p206 = scmp.eq.s32.totalorder %s27, 0
      %p207 = por %p205, %p206
      %p208 = scmp.ne.s32.totalorder %s194, %s195
      %p209 = scmp.eq.s32.totalorder %s28, 1
      %p210 = por %p208, %p209
      %p212 = scmp.ne.s32.totalorder %s195, %s211
      %p213 = scmp.eq.s32.totalorder %s28, 0
      %p214 = por %p212, %p213
      %s215 = ssub.s32 %s29, %s41
      %p216 = scmp.eq.s32.totalorder %s215, 0
      %s218 = sadd.s32 %s217, 1
      %s219 = scalar_select %p216, %s217, %s218
      %p222 = pneg %p216
      %p223 = scmp.eq.s32.totalorder %s22, 1
      %p224 = por %p222, %p223
      %p225 = scmp.ne.s32.totalorder %s217, %s220
      %p226 = scmp.eq.s32.totalorder %s22, 0
      %p227 = por %p225, %p226
      %p228 = scmp.ne.s32.totalorder %s217, %s220
      %p229 = scmp.eq.s32.totalorder %s27, 1
      %p230 = por %p228, %p229
      %p231 = scmp.ne.s32.totalorder %s220, %s221
      %p232 = scmp.eq.s32.totalorder %s27, 0
      %p233 = por %p231, %p232
      %p234 = scmp.ne.s32.totalorder %s220, %s221
      %p235 = scmp.eq.s32.totalorder %s28, 1
      %p236 = por %p234, %p235
      %p238 = scmp.ne.s32.totalorder %s221, %s237
      %p239 = scmp.eq.s32.totalorder %s28, 0
      %p240 = por %p238, %p239
      %s241 = ssub.s32 %s30, 1
      %p242 = scmp.gt.s32.totalorder %s241, 0
      %s243 = scalar_select %p242, %s241, 0
      %s244 = ssub.s32 %s37, 1
      %p245 = scmp.gt.s32.totalorder %s244, 0
      %s246 = scalar_select %p245, %s244, 0
      %s247 = ssub.s32 %s29, %s41
      %s248 = ssub.s32 %s243, %s246
      %s249 = sor.u32 %s247, %s248
      %p250 = scmp.eq.s32.totalorder %s249, 0
      %s252 = sadd.s32 %s251, 1
      %s253 = scalar_select %p250, %s251, %s252
      %p256 = pneg %p250
      %p257 = scmp.eq.s32.totalorder %s22, 1
      %p258 = por %p256, %p257
      %p259 = scmp.ne.s32.totalorder %s251, %s254
      %p260 = scmp.eq.s32.totalorder %s22, 0
      %p261 = por %p259, %p260
      %p262 = scmp.ne.s32.totalorder %s251, %s254
      %p263 = scmp.eq.s32.totalorder %s27, 1
      %p264 = por %p262, %p263
      %p265 = scmp.ne.s32.totalorder %s254, %s255
      %p266 = scmp.eq.s32.totalorder %s27, 0
      %p267 = por %p265, %p266
      %p268 = scmp.ne.s32.totalorder %s254, %s255
      %p269 = scmp.eq.s32.totalorder %s28, 1
      %p270 = por %p268, %p269
      %p272 = scmp.ne.s32.totalorder %s255, %s271
      %p273 = scmp.eq.s32.totalorder %s28, 0
      %p274 = por %p272, %p273
      %p275 = scmp.le.s32.totalorder 1, %s22
      %p276 = scmp.lt.s32.totalorder %s22, 3
      %p277 = pnand %p275, %p276
      %p278 = pneg %p277
      // Predicated region
      $region9: #{tpu_custom_call.1} parent=5 // pred_check
        _
      $region10: #{tpu_custom_call.1} parent=5 // pred_check_branch
        %280 = sbr.rel (%p277) target = $region12
      $region11: #{tpu_custom_call.1} parent=5 // pred_region
        %s281 = ssub.s32 %s22, 1
        // Predicated region
        $region13: #{tpu_custom_call.1} parent=11 // pred_check
          %p282 = pneg %p117
        $region14: #{tpu_custom_call.1} parent=11 // pred_check_branch
          %284 = sbr.rel (%p282) target = $region16
        $region15: #{tpu_custom_call.1} parent=11 // pred_region
          _
        $region16: #{tpu_custom_call.1} parent=11 // pred_fallthru
          _
      $region12: #{tpu_custom_call.1} parent=5 // pred_fallthru
        _
      %p285 = scmp.lt.s32.totalorder %s22, 2
      // Predicated region
      $region17: #{tpu_custom_call.1} parent=5 // pred_check
        %p286 = pneg %p285
      $region18: #{tpu_custom_call.1} parent=5 // pred_check_branch
        %288 = sbr.rel (%p286) target = $region20
      $region19: #{tpu_custom_call.1} parent=5 // pred_region
        // Predicated region
        $region21: #{tpu_custom_call.1} parent=19 // pred_check
          %p289 = pneg %p60
        $region22: #{tpu_custom_call.1} parent=19 // pred_check_branch
          %291 = sbr.rel (%p289) target = $region24
        $region23: #{tpu_custom_call.1} parent=19 // pred_region
          %s292 = sand.u32 %s50, 1
          %s293 = scalar_lea.sflag [#allocation5], %s292
          %s294 = sand.u32 %s50, 1
          %s295 = smul.addr %s294, 8
          %s296 = scalar_lea.vmem [#allocation4], %s295
          %p297 = scmp.lt.s32.totalorder %s30, 0
          %s298 = scalar_select %p297, %s30, 0
          %s299 = smul.u32 2, %s298
          %s301 = ssub.s32 128, 128
          %302 = vsyncadd %s293, %s301
          %s303 = smul.addr %s29, 2
          %s304 = sadd.s32 %s299, %s303
          %s305 = smul.addr %s304, 64
          %s306 = scalar_lea.hbm %s0, %s305
          %s308 = sshll.u32 %s296, 4
          %s309 = int_to_ptr.vmem [resolvable:$true] %s308
          %311 = dma.hbm_to_vmem [thread:$0]  %s306, 128, %s309, %s293
        $region24: #{tpu_custom_call.1} parent=19 // pred_fallthru
          _
        // Predicated region
        $region25: #{tpu_custom_call.1} parent=19 // pred_check
          %p312 = pneg %p90
        $region26: #{tpu_custom_call.1} parent=19 // pred_check_branch
          %314 = sbr.rel (%p312) target = $region28
        $region27: #{tpu_custom_call.1} parent=19 // pred_region
          %s315 = sand.u32 %s22, 1
          %s316 = scalar_lea.sflag [#allocation8], %s315
          %s317 = sand.u32 %s80, 1
          %s318 = smul.addr %s317, 256
          %s319 = scalar_lea.vmem [#allocation7], %s318
          %p320 = scmp.lt.s32.totalorder %s30, 0
          %s321 = scalar_select %p320, %s30, 0
          %s322 = smul.u32 32, %s321
          %s324 = ssub.s32 4096, 4096
          %325 = vsyncadd %s316, %s324
          %s326 = smul.addr %s322, 2
          %s327 = smul.addr %s326, 64
          %s328 = scalar_lea.hbm %s1, %s327
          %s329 = sshll.u32 %s319, 4
          %s330 = int_to_ptr.vmem [resolvable:$true] %s329
          %335 = dma.hbm_to_vmem [thread:$0]  %s328, 4096, %s330, %s316, 128, 128, 8
        $region28: #{tpu_custom_call.1} parent=19 // pred_fallthru
          _
        // Predicated region
        $region29: #{tpu_custom_call.1} parent=19 // pred_check
          %p336 = pneg %p143
        $region30: #{tpu_custom_call.1} parent=19 // pred_check_branch
          %338 = sbr.rel (%p336) target = $region32
        $region31: #{tpu_custom_call.1} parent=19 // pred_region
          %s339 = sand.u32 %s22, 1
          %s340 = scalar_lea.sflag [#allocation8], %s339
          %s341 = sand.u32 %s133, 1
          %s342 = smul.addr %s341, 256
          %s343 = scalar_lea.vmem [#allocation9], %s342
          %s344 = ssub.s32 %s30, 1
          %p345 = scmp.gt.s32.totalorder %s344, 0
          %s346 = scalar_select %p345, %s344, 0
          %s347 = smul.u32 2, %s346
          %s349 = ssub.s32 4096, 4096
          %350 = vsyncadd %s340, %s349
          %s351 = smul.addr %s347, 64
          %s352 = scalar_lea.hbm %s3, %s351
          %s353 = sshll.u32 %s343, 4
          %s354 = int_to_ptr.vmem [resolvable:$true] %s353
          %359 = dma.hbm_to_vmem [thread:$0]  %s352, 4096, %s354, %s340, 128, 128, 8
        $region32: #{tpu_custom_call.1} parent=19 // pred_fallthru
          _
        // Predicated region
        $region33: #{tpu_custom_call.1} parent=19 // pred_check
          %p360 = pneg %p175
        $region34: #{tpu_custom_call.1} parent=19 // pred_check_branch
          %362 = sbr.rel (%p360) target = $region36
        $region35: #{tpu_custom_call.1} parent=19 // pred_region
          %s363 = ssub.s32 %s30, 1
          %p364 = scmp.gt.s32.totalorder %s363, 0
          %s365 = scalar_select %p364, %s363, 0
          %s366 = smul.u32 2, %s365
          %p367 = scmp.lt.s32.totalorder %s366, 1
          %s368 = scalar_select %p367, %s366, 1
          %s369 = scalar_lea.vmem %s4, %s368
          %s370 = ssub.s32 %s30, 1
          %p371 = scmp.gt.s32.totalorder %s370, 0
          %s372 = scalar_select %p371, %s370, 0
          %s373 = smul.u32 2, %s372
        $region36: #{tpu_custom_call.1} parent=19 // pred_fallthru
          _
      $region20: #{tpu_custom_call.1} parent=5 // pred_fallthru
        _
      %p374 = scmp.le.s32.totalorder 1, %s22
      %p375 = scmp.lt.s32.totalorder %s22, 3
      %p376 = pnand %p374, %p375
      %p377 = pneg %p376
      // Predicated region
      $region37: #{tpu_custom_call.1} parent=5 // pred_check
        _
      $region38: #{tpu_custom_call.1} parent=5 // pred_check_branch
        %379 = sbr.rel (%p376) target = $region40
      $region39: #{tpu_custom_call.1} parent=5 // pred_region
        %s380 = ssub.s32 %s22, 1
        %s381 = sand.u32 %s53, 1
        %s382 = scalar_lea.sflag [#allocation5], %s381
        %s383 = sand.u32 %s53, 1
        %s384 = smul.addr %s383, 8
        %s385 = scalar_lea.vmem [#allocation4], %s384
        // Predicated region
        $region41: #{tpu_custom_call.1} parent=39 // pred_check
          %p386 = pneg %p66
        $region42: #{tpu_custom_call.1} parent=39 // pred_check_branch
          %388 = sbr.rel (%p386) target = $region44
        $region43: #{tpu_custom_call.1} parent=39 // pred_region
          %389 = dma.done %s382, 128
        $region44: #{tpu_custom_call.1} parent=39 // pred_fallthru
          _
        %s390 = sand.u32 %s27, 1
        %s391 = scalar_lea.sflag [#allocation8], %s390
        %s392 = sand.u32 %s83, 1
        %s393 = smul.addr %s392, 256
        %s394 = scalar_lea.vmem [#allocation7], %s393
        // Predicated region
        $region45: #{tpu_custom_call.1} parent=39 // pred_check
          %p395 = pneg %p96
        $region46: #{tpu_custom_call.1} parent=39 // pred_check_branch
          %397 = sbr.rel (%p395) target = $region48
        $region47: #{tpu_custom_call.1} parent=39 // pred_region
          %398 = dma.done %s391, 4096
        $region48: #{tpu_custom_call.1} parent=39 // pred_fallthru
          _
        %s399 = sand.u32 %s27, 1
        %s400 = scalar_lea.sflag [#allocation8], %s399
        %s401 = sand.u32 %s136, 1
        %s402 = smul.addr %s401, 256
        %s403 = scalar_lea.vmem [#allocation9], %s402
        // Predicated region
        $region49: #{tpu_custom_call.1} parent=39 // pred_check
          %p404 = pneg %p149
        $region50: #{tpu_custom_call.1} parent=39 // pred_check_branch
          %406 = sbr.rel (%p404) target = $region52
        $region51: #{tpu_custom_call.1} parent=39 // pred_region
          %407 = dma.done %s400, 4096
        $region52: #{tpu_custom_call.1} parent=39 // pred_fallthru
          _
        %s408 = sand.u32 %s53, 1
        %s409 = scalar_lea.sflag [#allocation5], %s408
        %s410 = sand.u32 %s53, 1
        %s411 = smul.addr %s410, 8
        %s412 = scalar_lea.vmem [#allocation4], %s411
        %p413 = pneg %p66
        %p414 = pneg %p63
        %s415 = sand.u32 %s27, 1
        %s416 = scalar_lea.sflag [#allocation8], %s415
        %s417 = sand.u32 %s83, 1
        %s418 = smul.addr %s417, 256
        %s419 = scalar_lea.vmem [#allocation7], %s418
        %p420 = pneg %p96
        %p421 = pneg %p93
        %p422 = pneg %p117
        %p423 = pneg %p114
        %s424 = sand.u32 %s27, 1
        %s425 = scalar_lea.sflag [#allocation8], %s424
        %s426 = sand.u32 %s136, 1
        %s427 = smul.addr %s426, 256
        %s428 = scalar_lea.vmem [#allocation9], %s427
        %p429 = pneg %p149
        %p430 = pneg %p146
        %s431 = ssub.s32 %s32, 1
        %p432 = scmp.gt.s32.totalorder %s431, 0
        %s433 = scalar_select %p432, %s431, 0
        %s434 = smul.u32 2, %s433
        %p435 = scmp.lt.s32.totalorder %s434, 1
        %s436 = scalar_select %p435, %s434, 1
        %s437 = scalar_lea.vmem %s4, %s436
        %p438 = pneg %p181
        %p439 = pneg %p178
        %p440 = pneg %p207
        %p441 = pneg %p204
        %p442 = pneg %p233
        %p443 = pneg %p230
        %p444 = pneg %p267
        %p445 = pneg %p264
        %s446 = sand.u32 %s27, 1
        %s447 = scalar_lea.sflag [#allocation6], %s446
        %s448 = sand.u32 %s254, 1
        %s449 = smul.addr %s448, 16
        %s450 = scalar_lea.vmem [#allocation13], %s449
        %p451 = scmp.lt.s32.totalorder %s32, 0
        %s452 = scalar_select %p451, %s32, 0
        %s453 = smul.u32 2, %s452
        %p454 = scmp.lt.s32.totalorder %s32, 0
        %s455 = scalar_select %p454, %s32, 0
        %s456 = smul.u32 32, %s455
        %s457 = ssub.s32 %s32, 1
        %p458 = scmp.gt.s32.totalorder %s457, 0
        %s459 = scalar_select %p458, %s457, 0
        %s460 = smul.u32 2, %s459
        %s461 = ssub.s32 %s32, 1
        %p462 = scmp.gt.s32.totalorder %s461, 0
        %s463 = scalar_select %p462, %s461, 0
        %s464 = smul.u32 2, %s463
        %p465 = scmp.lt.s32.totalorder %s464, 1
        %s466 = scalar_select %p465, %s464, 1
        %s467 = scalar_lea.vmem %s4, %s466
        %s468 = ssub.s32 %s32, 1
        %p469 = scmp.gt.s32.totalorder %s468, 0
        %s470 = scalar_select %p469, %s468, 0
        %s471 = smul.u32 2, %s470
        %s472 = ssub.s32 %s32, 1
        %p473 = scmp.gt.s32.totalorder %s472, 0
        %s474 = scalar_select %p473, %s472, 0
        %s475 = smul.u32 2, %s474
        %p476 = scmp.lt.s32.totalorder %s32, 1
        %p477 = scmp.eq.s32.totalorder %s32, 0
        // Predicated region
        $region53: #{tpu_custom_call.1} parent=39 // pred_check
          %p478 = pneg %p477
        $region54: #{tpu_custom_call.1} parent=39 // pred_check_branch
          %480 = sbr.rel (%p478) target = $region56
        $region55: #{tpu_custom_call.1} parent=39 // pred_region
          %481 = vst [vmem:[#allocation2] sm:$0xff] 0.0
          %482 = vst [vmem:[#allocation2 + $0x8] sm:$0xff] 0.0
        $region56: #{tpu_custom_call.1} parent=39 // pred_fallthru
          _
        // Predicated region
        $region57: #{tpu_custom_call.1} parent=39 // pred_check
          %p483 = pneg %p476
        $region58: #{tpu_custom_call.1} parent=39 // pred_check_branch
          %485 = sbr.rel (%p483) target = $region60
        $region59: #{tpu_custom_call.1} parent=39 // pred_region
          %v486 = vld [vmem:[#allocation2] sm:$0xff]
          %v487 = vld [vmem:[#allocation2 + $0x8] sm:$0xff]
          %v488 = vld [vmem:[%s385] sm:$0xff]
          %v489 = vld [vmem:[%s394] sm:$0xff]
          %v490 = vld [vmem:[%s394 + $0x8] sm:$0xff]
          %v491 = vld [vmem:[%s394 + $0x10] sm:$0xff]
          %v492 = vld [vmem:[%s394 + $0x18] sm:$0xff]
          %v493 = vld [vmem:[%s394 + $0x20] sm:$0xff]
          %v494 = vld [vmem:[%s394 + $0x28] sm:$0xff]
          %v495 = vld [vmem:[%s394 + $0x30] sm:$0xff]
          %v496 = vld [vmem:[%s394 + $0x38] sm:$0xff]
          %v497 = vld [vmem:[%s394 + $0x40] sm:$0xff]
          %v498 = vld [vmem:[%s394 + $0x48] sm:$0xff]
          %v499 = vld [vmem:[%s394 + $0x50] sm:$0xff]
          %v500 = vld [vmem:[%s394 + $0x58] sm:$0xff]
          %v501 = vld [vmem:[%s394 + $0x60] sm:$0xff]
          %v502 = vld [vmem:[%s394 + $0x68] sm:$0xff]
          %v503 = vld [vmem:[%s394 + $0x70] sm:$0xff]
          %v504 = vld [vmem:[%s394 + $0x78] sm:$0xff]
          %v505 = vld [vmem:[%s394 + $0x80] sm:$0xff]
          %v506 = vld [vmem:[%s394 + $0x88] sm:$0xff]
          %v507 = vld [vmem:[%s394 + $0x90] sm:$0xff]
          %v508 = vld [vmem:[%s394 + $0x98] sm:$0xff]
          %v509 = vld [vmem:[%s394 + $0xa0] sm:$0xff]
          %v510 = vld [vmem:[%s394 + $0xa8] sm:$0xff]
          %v511 = vld [vmem:[%s394 + $0xb0] sm:$0xff]
          %v512 = vld [vmem:[%s394 + $0xb8] sm:$0xff]
          %v513 = vld [vmem:[%s394 + $0xc0] sm:$0xff]
          %v514 = vld [vmem:[%s394 + $0xc8] sm:$0xff]
          %v515 = vld [vmem:[%s394 + $0xd0] sm:$0xff]
          %v516 = vld [vmem:[%s394 + $0xd8] sm:$0xff]
          %v517 = vld [vmem:[%s394 + $0xe0] sm:$0xff]
          %v518 = vld [vmem:[%s394 + $0xe8] sm:$0xff]
          %v519 = vld [vmem:[%s394 + $0xf0] sm:$0xff]
          %v520 = vld [vmem:[%s394 + $0xf8] sm:$0xff]
          %v522 = vunpack.c.l.b16 %v488
          %v523 = vunpack.c.h.b16 %v488
          %v524 = vpack.c.b16 %v522, %v522
          %v525 = vpack.c.b16 %v523, %v523
          %v560 = vunpack.c.l.b16 %v489
          %v561 = vunpack.c.h.b16 %v489
          %v562 = vunpack.c.l.b16 %v490
          %v563 = vunpack.c.h.b16 %v490
          %v564 = vunpack.c.l.b16 %v491
          %v565 = vunpack.c.h.b16 %v491
          %v566 = vunpack.c.l.b16 %v492
          %v567 = vunpack.c.h.b16 %v492
          %v568 = vunpack.c.l.b16 %v493
          %v569 = vunpack.c.h.b16 %v493
          %v570 = vunpack.c.l.b16 %v494
          %v571 = vunpack.c.h.b16 %v494
          %v572 = vunpack.c.l.b16 %v495
          %v573 = vunpack.c.h.b16 %v495
          %v574 = vunpack.c.l.b16 %v496
          %v575 = vunpack.c.h.b16 %v496
          %v576 = vunpack.c.l.b16 %v497
          %v577 = vunpack.c.h.b16 %v497
          %v578 = vunpack.c.l.b16 %v498
          %v579 = vunpack.c.h.b16 %v498
          %v580 = vunpack.c.l.b16 %v499
          %v581 = vunpack.c.h.b16 %v499
          %v582 = vunpack.c.l.b16 %v500
          %v583 = vunpack.c.h.b16 %v500
          %v584 = vunpack.c.l.b16 %v501
          %v585 = vunpack.c.h.b16 %v501
          %v586 = vunpack.c.l.b16 %v502
          %v587 = vunpack.c.h.b16 %v502
          %v588 = vunpack.c.l.b16 %v503
          %v589 = vunpack.c.h.b16 %v503
          %v590 = vunpack.c.l.b16 %v504
          %v591 = vunpack.c.h.b16 %v504
          %v592 = vunpack.c.l.b16 %v505
          %v593 = vunpack.c.h.b16 %v505
          %v594 = vunpack.c.l.b16 %v506
          %v595 = vunpack.c.h.b16 %v506
          %v596 = vunpack.c.l.b16 %v507
          %v597 = vunpack.c.h.b16 %v507
          %v598 = vunpack.c.l.b16 %v508
          %v599 = vunpack.c.h.b16 %v508
          %v600 = vunpack.c.l.b16 %v509
          %v601 = vunpack.c.h.b16 %v509
          %v602 = vunpack.c.l.b16 %v510
          %v603 = vunpack.c.h.b16 %v510
          %v604 = vunpack.c.l.b16 %v511
          %v605 = vunpack.c.h.b16 %v511
          %v606 = vunpack.c.l.b16 %v512
          %v607 = vunpack.c.h.b16 %v512
          %v608 = vunpack.c.l.b16 %v513
          %v609 = vunpack.c.h.b16 %v513
          %v610 = vunpack.c.l.b16 %v514
          %v611 = vunpack.c.h.b16 %v514
          %v612 = vunpack.c.l.b16 %v515
          %v613 = vunpack.c.h.b16 %v515
          %v614 = vunpack.c.l.b16 %v516
          %v615 = vunpack.c.h.b16 %v516
          %v616 = vunpack.c.l.b16 %v517
          %v617 = vunpack.c.h.b16 %v517
          %v618 = vunpack.c.l.b16 %v518
          %v619 = vunpack.c.h.b16 %v518
          %v620 = vunpack.c.l.b16 %v519
          %v621 = vunpack.c.h.b16 %v519
          %v622 = vunpack.c.l.b16 %v520
          %v623 = vunpack.c.h.b16 %v520
          %v624 = vpack.c.b16 %v562, %v560
          %v625 = vpack.c.b16 %v563, %v561
          %v626 = vpack.c.b16 %v566, %v564
          %v627 = vpack.c.b16 %v567, %v565
          %v628 = vpack.c.b16 %v570, %v568
          %v629 = vpack.c.b16 %v571, %v569
          %v630 = vpack.c.b16 %v574, %v572
          %v631 = vpack.c.b16 %v575, %v573
          %v632 = vpack.c.b16 %v578, %v576
          %v633 = vpack.c.b16 %v579, %v577
          %v634 = vpack.c.b16 %v582, %v580
          %v635 = vpack.c.b16 %v583, %v581
          %v636 = vpack.c.b16 %v586, %v584
          %v637 = vpack.c.b16 %v587, %v585
          %v638 = vpack.c.b16 %v590, %v588
          %v639 = vpack.c.b16 %v591, %v589
          %v640 = vpack.c.b16 %v594, %v592
          %v641 = vpack.c.b16 %v595, %v593
          %v642 = vpack.c.b16 %v598, %v596
          %v643 = vpack.c.b16 %v599, %v597
          %v644 = vpack.c.b16 %v602, %v600
          %v645 = vpack.c.b16 %v603, %v601
          %v646 = vpack.c.b16 %v606, %v604
          %v647 = vpack.c.b16 %v607, %v605
          %v648 = vpack.c.b16 %v610, %v608
          %v649 = vpack.c.b16 %v611, %v609
          %v650 = vpack.c.b16 %v614, %v612
          %v651 = vpack.c.b16 %v615, %v613
          %v652 = vpack.c.b16 %v618, %v616
          %v653 = vpack.c.b16 %v619, %v617
          %v654 = vpack.c.b16 %v622, %v620
          %v655 = vpack.c.b16 %v623, %v621
          %688 = vmatprep.subr.bf16.mxu0 %v625
          %689 = vmatpush1.bf16.msra.mxu0 %v624
          %690 = vmatprep.subr.bf16.mxu0 %v627
          %691 = vmatpush1.bf16.msra.mxu0 %v626
          %692 = vmatprep.subr.bf16.mxu0 %v629
          %693 = vmatpush1.bf16.msra.mxu0 %v628
          %694 = vmatprep.subr.bf16.mxu0 %v631
          %695 = vmatpush1.bf16.msra.mxu0 %v630
          %696 = vmatprep.subr.bf16.mxu0 %v633
          %697 = vmatpush1.bf16.msra.mxu0 %v632
          %698 = vmatprep.subr.bf16.mxu0 %v635
          %699 = vmatpush1.bf16.msra.mxu0 %v634
          %700 = vmatprep.subr.bf16.mxu0 %v637
          %701 = vmatpush1.bf16.msra.mxu0 %v636
          %702 = vmatprep.subr.bf16.mxu0 %v639
          %703 = vmatpush1.bf16.msra.mxu0 %v638
          %704 = vmatprep.subr.bf16.mxu0 %v641
          %705 = vmatpush1.bf16.msra.mxu0 %v640
          %706 = vmatprep.subr.bf16.mxu0 %v643
          %707 = vmatpush1.bf16.msra.mxu0 %v642
          %708 = vmatprep.subr.bf16.mxu0 %v645
          %709 = vmatpush1.bf16.msra.mxu0 %v644
          %710 = vmatprep.subr.bf16.mxu0 %v647
          %711 = vmatpush1.bf16.msra.mxu0 %v646
          %712 = vmatprep.subr.bf16.mxu0 %v649
          %713 = vmatpush1.bf16.msra.mxu0 %v648
          %714 = vmatprep.subr.bf16.mxu0 %v651
          %715 = vmatpush1.bf16.msra.mxu0 %v650
          %716 = vmatprep.subr.bf16.mxu0 %v653
          %717 = vmatpush1.bf16.msra.mxu0 %v652
          %718 = vmatprep.subr.bf16.mxu0 %v655
          %719 = vmatpush1.bf16.msra.mxu0 %v654
          %720 = vmatprep.mubr.bf16.mxu0 %v525
          %721 = vmatmul.mubr.bf16.gmra.mrb[0].mxu0 %v524
          %v722 = vpop.f32.mrb[0].mxu0
          %v723 = vadd.f32 0.0, %v722
          %v724 = vpop.f32.mrb[0].mxu0
          %v725 = vadd.f32 0.0, %v724
          %v726 = vpop.f32.mrb[0].mxu0
          %v727 = vpop.f32.mrb[0].mxu0
          %728 = vdwg.mxu0
          %v729 = vadd.f32 %v486, %v723
          %v730 = vadd.f32 %v487, %v725
          %731 = vst [vmem:[#allocation2] sm:$0xff] %v729
          %732 = vst [vmem:[#allocation2 + $0x8] sm:$0xff] %v730
        $region60: #{tpu_custom_call.1} parent=39 // pred_fallthru
          _
        // Predicated region
        $region61: #{tpu_custom_call.1} parent=39 // pred_check
          %p733 = pneg %p477
        $region62: #{tpu_custom_call.1} parent=39 // pred_check_branch
          %735 = sbr.rel (%p733) target = $region64
        $region63: #{tpu_custom_call.1} parent=39 // pred_region
          %v736 = vld [vmem:[#allocation2] sm:$0xff]
          %v737 = vld [vmem:[#allocation2 + $0x8] sm:$0xff]
          %v738 = vld [vmem:[%s2] sm:$0x3]
          %v740 = vlaneseq
          %v741 = vshrl.u32 %v740, 7
          %v742 = vsub.s32 0, %v741
          %v743 = vrot.slane %v738, %v742
          %v744 = vlaneseq
          %v745 = vshrl.u32 %v744, 7
          %v746 = vsub.s32 1, %v745
          %v747 = vrot.slane %v738, %v746
          %v750 = vadd.f32 %v736, %v743
          %v751 = vadd.f32 %v737, %v747
          %v752 = vxor.u32 %v750, 2147483648
          %v753 = vxor.u32 %v751, 2147483648
          %v754 = vmul.f32 %v752, 1.442695
          %v755 = vpow.pop %v754
          %v756 = vmul.f32 %v753, 1.442695
          %v757 = vpow.pop %v756
          %v758 = vadd.f32 %v755, 1.0
          %v759 = vadd.f32 %v757, 1.0
          %v760 = vrcp.pop %v758
          %v761 = vmul.f32 1.0, %v760
          %v762 = vrcp.pop %v759
          %v763 = vmul.f32 1.0, %v762
          %v764 = vpack.c.bf16 %v761, %v761
          %v765 = vpack.c.bf16 %v763, %v763
          %v768 = vunpack.c.l.b16 %v764
          %v769 = vunpack.c.l.b16 %v765
          %v770 = vpack.c.b16 %v769, %v768
          %772 = vst [vmem:[#allocation3] sm:$0xff] %v770
          %773 = vst [vmem:[#allocation11] sm:$0xff] %v761
          %774 = vst [vmem:[#allocation10] sm:$0xff] %v763
        $region64: #{tpu_custom_call.1} parent=39 // pred_fallthru
          _
        %p775 = scmp.ge.s32.totalorder %s32, 1
        // Predicated region
        $region65: #{tpu_custom_call.1} parent=39 // pred_check
          %p776 = pneg %p775
        $region66: #{tpu_custom_call.1} parent=39 // pred_check_branch
          %778 = sbr.rel (%p776) target = $region68
        $region67: #{tpu_custom_call.1} parent=39 // pred_region
          %v779 = vld [vmem:[#allocation3] sm:$0xff]
          %v780 = vld [vmem:[%s403] sm:$0xff]
          %v781 = vld [vmem:[%s403 + $0x8] sm:$0xff]
          %v782 = vld [vmem:[%s403 + $0x10] sm:$0xff]
          %v783 = vld [vmem:[%s403 + $0x18] sm:$0xff]
          %v784 = vld [vmem:[%s403 + $0x20] sm:$0xff]
          %v785 = vld [vmem:[%s403 + $0x28] sm:$0xff]
          %v786 = vld [vmem:[%s403 + $0x30] sm:$0xff]
          %v787 = vld [vmem:[%s403 + $0x38] sm:$0xff]
          %v788 = vld [vmem:[%s403 + $0x40] sm:$0xff]
          %v789 = vld [vmem:[%s403 + $0x48] sm:$0xff]
          %v790 = vld [vmem:[%s403 + $0x50] sm:$0xff]
          %v791 = vld [vmem:[%s403 + $0x58] sm:$0xff]
          %v792 = vld [vmem:[%s403 + $0x60] sm:$0xff]
          %v793 = vld [vmem:[%s403 + $0x68] sm:$0xff]
          %v794 = vld [vmem:[%s403 + $0x70] sm:$0xff]
          %v795 = vld [vmem:[%s403 + $0x78] sm:$0xff]
          %v796 = vld [vmem:[%s403 + $0x80] sm:$0xff]
          %v797 = vld [vmem:[%s403 + $0x88] sm:$0xff]
          %v798 = vld [vmem:[%s403 + $0x90] sm:$0xff]
          %v799 = vld [vmem:[%s403 + $0x98] sm:$0xff]
          %v800 = vld [vmem:[%s403 + $0xa0] sm:$0xff]
          %v801 = vld [vmem:[%s403 + $0xa8] sm:$0xff]
          %v802 = vld [vmem:[%s403 + $0xb0] sm:$0xff]
          %v803 = vld [vmem:[%s403 + $0xb8] sm:$0xff]
          %v804 = vld [vmem:[%s403 + $0xc0] sm:$0xff]
          %v805 = vld [vmem:[%s403 + $0xc8] sm:$0xff]
          %v806 = vld [vmem:[%s403 + $0xd0] sm:$0xff]
          %v807 = vld [vmem:[%s403 + $0xd8] sm:$0xff]
          %v808 = vld [vmem:[%s403 + $0xe0] sm:$0xff]
          %v809 = vld [vmem:[%s403 + $0xe8] sm:$0xff]
          %v810 = vld [vmem:[%s403 + $0xf0] sm:$0xff]
          %v811 = vld [vmem:[%s403 + $0xf8] sm:$0xff]
          %v812 = vld [vmem:[%s467] sm:$0x3]
          %v814 = vlaneseq
          %v815 = vshrl.u32 %v814, 7
          %v816 = vsub.s32 0, %v815
          %v817 = vrot.slane %v812, %v816
          %v818 = vlaneseq
          %v819 = vshrl.u32 %v818, 7
          %v820 = vsub.s32 1, %v819
          %v821 = vrot.slane %v812, %v820
          %v825 = vunpack.c.l.b16 %v779
          %v826 = vunpack.c.h.b16 %v779
          %v827 = vpack.c.b16 %v825, %v825
          %v828 = vpack.c.b16 %v826, %v826
          %v863 = vunpack.c.l.b16 %v780
          %v864 = vunpack.c.h.b16 %v780
          %v865 = vunpack.c.l.b16 %v781
          %v866 = vunpack.c.h.b16 %v781
          %v867 = vunpack.c.l.b16 %v782
          %v868 = vunpack.c.h.b16 %v782
          %v869 = vunpack.c.l.b16 %v783
          %v870 = vunpack.c.h.b16 %v783
          %v871 = vunpack.c.l.b16 %v784
          %v872 = vunpack.c.h.b16 %v784
          %v873 = vunpack.c.l.b16 %v785
          %v874 = vunpack.c.h.b16 %v785
          %v875 = vunpack.c.l.b16 %v786
          %v876 = vunpack.c.h.b16 %v786
          %v877 = vunpack.c.l.b16 %v787
          %v878 = vunpack.c.h.b16 %v787
          %v879 = vunpack.c.l.b16 %v788
          %v880 = vunpack.c.h.b16 %v788
          %v881 = vunpack.c.l.b16 %v789
          %v882 = vunpack.c.h.b16 %v789
          %v883 = vunpack.c.l.b16 %v790
          %v884 = vunpack.c.h.b16 %v790
          %v885 = vunpack.c.l.b16 %v791
          %v886 = vunpack.c.h.b16 %v791
          %v887 = vunpack.c.l.b16 %v792
          %v888 = vunpack.c.h.b16 %v792
          %v889 = vunpack.c.l.b16 %v793
          %v890 = vunpack.c.h.b16 %v793
          %v891 = vunpack.c.l.b16 %v794
          %v892 = vunpack.c.h.b16 %v794
          %v893 = vunpack.c.l.b16 %v795
          %v894 = vunpack.c.h.b16 %v795
          %v895 = vunpack.c.l.b16 %v796
          %v896 = vunpack.c.h.b16 %v796
          %v897 = vunpack.c.l.b16 %v797
          %v898 = vunpack.c.h.b16 %v797
          %v899 = vunpack.c.l.b16 %v798
          %v900 = vunpack.c.h.b16 %v798
          %v901 = vunpack.c.l.b16 %v799
          %v902 = vunpack.c.h.b16 %v799
          %v903 = vunpack.c.l.b16 %v800
          %v904 = vunpack.c.h.b16 %v800
          %v905 = vunpack.c.l.b16 %v801
          %v906 = vunpack.c.h.b16 %v801
          %v907 = vunpack.c.l.b16 %v802
          %v908 = vunpack.c.h.b16 %v802
          %v909 = vunpack.c.l.b16 %v803
          %v910 = vunpack.c.h.b16 %v803
          %v911 = vunpack.c.l.b16 %v804
          %v912 = vunpack.c.h.b16 %v804
          %v913 = vunpack.c.l.b16 %v805
          %v914 = vunpack.c.h.b16 %v805
          %v915 = vunpack.c.l.b16 %v806
          %v916 = vunpack.c.h.b16 %v806
          %v917 = vunpack.c.l.b16 %v807
          %v918 = vunpack.c.h.b16 %v807
          %v919 = vunpack.c.l.b16 %v808
          %v920 = vunpack.c.h.b16 %v808
          %v921 = vunpack.c.l.b16 %v809
          %v922 = vunpack.c.h.b16 %v809
          %v923 = vunpack.c.l.b16 %v810
          %v924 = vunpack.c.h.b16 %v810
          %v925 = vunpack.c.l.b16 %v811
          %v926 = vunpack.c.h.b16 %v811
          %v927 = vpack.c.b16 %v865, %v863
          %v928 = vpack.c.b16 %v866, %v864
          %v929 = vpack.c.b16 %v869, %v867
          %v930 = vpack.c.b16 %v870, %v868
          %v931 = vpack.c.b16 %v873, %v871
          %v932 = vpack.c.b16 %v874, %v872
          %v933 = vpack.c.b16 %v877, %v875
          %v934 = vpack.c.b16 %v878, %v876
          %v935 = vpack.c.b16 %v881, %v879
          %v936 = vpack.c.b16 %v882, %v880
          %v937 = vpack.c.b16 %v885, %v883
          %v938 = vpack.c.b16 %v886, %v884
          %v939 = vpack.c.b16 %v889, %v887
          %v940 = vpack.c.b16 %v890, %v888
          %v941 = vpack.c.b16 %v893, %v891
          %v942 = vpack.c.b16 %v894, %v892
          %v943 = vpack.c.b16 %v897, %v895
          %v944 = vpack.c.b16 %v898, %v896
          %v945 = vpack.c.b16 %v901, %v899
          %v946 = vpack.c.b16 %v902, %v900
          %v947 = vpack.c.b16 %v905, %v903
          %v948 = vpack.c.b16 %v906, %v904
          %v949 = vpack.c.b16 %v909, %v907
          %v950 = vpack.c.b16 %v910, %v908
          %v951 = vpack.c.b16 %v913, %v911
          %v952 = vpack.c.b16 %v914, %v912
          %v953 = vpack.c.b16 %v917, %v915
          %v954 = vpack.c.b16 %v918, %v916
          %v955 = vpack.c.b16 %v921, %v919
          %v956 = vpack.c.b16 %v922, %v920
          %v957 = vpack.c.b16 %v925, %v923
          %v958 = vpack.c.b16 %v926, %v924
          %991 = vmatprep.subr.bf16.mxu0 %v928
          %992 = vmatpush1.bf16.msra.mxu0 %v927
          %993 = vmatprep.subr.bf16.mxu0 %v930
          %994 = vmatpush1.bf16.msra.mxu0 %v929
          %995 = vmatprep.subr.bf16.mxu0 %v932
          %996 = vmatpush1.bf16.msra.mxu0 %v931
          %997 = vmatprep.subr.bf16.mxu0 %v934
          %998 = vmatpush1.bf16.msra.mxu0 %v933
          %999 = vmatprep.subr.bf16.mxu0 %v936
          %1000 = vmatpush1.bf16.msra.mxu0 %v935
          %1001 = vmatprep.subr.bf16.mxu0 %v938
          %1002 = vmatpush1.bf16.msra.mxu0 %v937
          %1003 = vmatprep.subr.bf16.mxu0 %v940
          %1004 = vmatpush1.bf16.msra.mxu0 %v939
          %1005 = vmatprep.subr.bf16.mxu0 %v942
          %1006 = vmatpush1.bf16.msra.mxu0 %v941
          %1007 = vmatprep.subr.bf16.mxu0 %v944
          %1008 = vmatpush1.bf16.msra.mxu0 %v943
          %1009 = vmatprep.subr.bf16.mxu0 %v946
          %1010 = vmatpush1.bf16.msra.mxu0 %v945
          %1011 = vmatprep.subr.bf16.mxu0 %v948
          %1012 = vmatpush1.bf16.msra.mxu0 %v947
          %1013 = vmatprep.subr.bf16.mxu0 %v950
          %1014 = vmatpush1.bf16.msra.mxu0 %v949
          %1015 = vmatprep.subr.bf16.mxu0 %v952
          %1016 = vmatpush1.bf16.msra.mxu0 %v951
          %1017 = vmatprep.subr.bf16.mxu0 %v954
          %1018 = vmatpush1.bf16.msra.mxu0 %v953
          %1019 = vmatprep.subr.bf16.mxu0 %v956
          %1020 = vmatpush1.bf16.msra.mxu0 %v955
          %1021 = vmatprep.subr.bf16.mxu0 %v958
          %1022 = vmatpush1.bf16.msra.mxu0 %v957
          %1023 = vmatprep.mubr.bf16.mxu0 %v828
          %1024 = vmatmul.mubr.bf16.gmra.mrb[0].mxu0 %v827
          %v1025 = vpop.f32.mrb[0].mxu0
          %v1026 = vadd.f32 %v817, %v1025
          %v1027 = vpop.f32.mrb[0].mxu0
          %v1028 = vadd.f32 %v821, %v1027
          %v1029 = vpop.f32.mrb[0].mxu0
          %v1030 = vpop.f32.mrb[0].mxu0
          %1031 = vdwg.mxu0
          %1032 = vst [vmem:[%s450] sm:$0xff] %v1026
          %1033 = vst [vmem:[%s450 + $0x8] sm:$0xff] %v1028
        $region68: #{tpu_custom_call.1} parent=39 // pred_fallthru
          _
        %s1034 = sand.u32 %s27, 1
        %s1035 = scalar_lea.sflag [#allocation6], %s1034
        %s1036 = sand.u32 %s254, 1
        %s1037 = smul.addr %s1036, 16
        %s1038 = scalar_lea.vmem [#allocation13], %s1037
        // Predicated region
        $region69: #{tpu_custom_call.1} parent=39 // pred_check
          %p1039 = pneg %p204
        $region70: #{tpu_custom_call.1} parent=39 // pred_check_branch
          %1041 = sbr.rel (%p1039) target = $region72
        $region71: #{tpu_custom_call.1} parent=39 // pred_region
          %s1043 = ssub.s32 128, 128
          %1044 = vsyncadd [#allocation6], %s1043
          %s1045 = smul.addr %s31, 128
          %s1046 = scalar_lea.hbm %s5, %s1045
          %s1048 = sshll.u32 [#allocation10], 4
          %s1049 = int_to_ptr.vmem [resolvable:$true] %s1048
          %1051 = dma.vmem_to_hbm [thread:$0]  %s1049, 128, %s1046, [#allocation6]
        $region72: #{tpu_custom_call.1} parent=39 // pred_fallthru
          _
        // Predicated region
        $region73: #{tpu_custom_call.1} parent=39 // pred_check
          %p1052 = pneg %p230
        $region74: #{tpu_custom_call.1} parent=39 // pred_check_branch
          %1054 = sbr.rel (%p1052) target = $region76
        $region75: #{tpu_custom_call.1} parent=39 // pred_region
          %s1056 = ssub.s32 128, 128
          %1057 = vsyncadd [#allocation12], %s1056
          %s1058 = smul.addr %s31, 128
          %s1059 = scalar_lea.hbm %s6, %s1058
          %s1061 = sshll.u32 [#allocation11], 4
          %s1062 = int_to_ptr.vmem [resolvable:$true] %s1061
          %1064 = dma.vmem_to_hbm [thread:$0]  %s1062, 128, %s1059, [#allocation12]
        $region76: #{tpu_custom_call.1} parent=39 // pred_fallthru
          _
        // Predicated region
        $region77: #{tpu_custom_call.1} parent=39 // pred_check
          %p1065 = pneg %p264
        $region78: #{tpu_custom_call.1} parent=39 // pred_check_branch
          %1067 = sbr.rel (%p1065) target = $region80
        $region79: #{tpu_custom_call.1} parent=39 // pred_region
          %s1068 = ssub.s32 %s32, 1
          %p1069 = scmp.gt.s32.totalorder %s1068, 0
          %s1070 = scalar_select %p1069, %s1068, 0
          %s1071 = smul.u32 2, %s1070
          %s1073 = ssub.s32 256, 256
          %1074 = vsyncadd %s1035, %s1073
          %s1075 = smul.addr %s31, 2
          %s1076 = sadd.s32 %s1071, %s1075
          %s1077 = smul.addr %s1076, 128
          %s1078 = scalar_lea.hbm %s7, %s1077
          %s1080 = sshll.u32 %s1038, 4
          %s1081 = int_to_ptr.vmem [resolvable:$true] %s1080
          %1083 = dma.vmem_to_hbm [thread:$0]  %s1081, 256, %s1078, %s1035
        $region80: #{tpu_custom_call.1} parent=39 // pred_fallthru
          _
        // Predicated region
        $region81: #{tpu_custom_call.1} parent=39 // pred_check
          %p1084 = pneg %p204
        $region82: #{tpu_custom_call.1} parent=39 // pred_check_branch
          %1086 = sbr.rel (%p1084) target = $region84
        $region83: #{tpu_custom_call.1} parent=39 // pred_region
          %1087 = dma.done [#allocation6], 128
        $region84: #{tpu_custom_call.1} parent=39 // pred_fallthru
          _
        // Predicated region
        $region85: #{tpu_custom_call.1} parent=39 // pred_check
          %p1088 = pneg %p230
        $region86: #{tpu_custom_call.1} parent=39 // pred_check_branch
          %1090 = sbr.rel (%p1088) target = $region88
        $region87: #{tpu_custom_call.1} parent=39 // pred_region
          %1091 = dma.done [#allocation12], 128
        $region88: #{tpu_custom_call.1} parent=39 // pred_fallthru
          _
      $region40: #{tpu_custom_call.1} parent=5 // pred_fallthru
        _
      %p1092 = scmp.le.s32.totalorder 2, %s22
      // Predicated region
      $region89: #{tpu_custom_call.1} parent=5 // pred_check
        %p1093 = pneg %p1092
      $region90: #{tpu_custom_call.1} parent=5 // pred_check_branch
        %1095 = sbr.rel (%p1093) target = $region92
      $region91: #{tpu_custom_call.1} parent=5 // pred_region
        %s1096 = ssub.s32 %s22, 2
        // Predicated region
        $region93: #{tpu_custom_call.1} parent=91 // pred_check
          %p1097 = pneg %p270
        $region94: #{tpu_custom_call.1} parent=91 // pred_check_branch
          %1099 = sbr.rel (%p1097) target = $region96
        $region95: #{tpu_custom_call.1} parent=91 // pred_region
          %s1100 = sand.u32 %s28, 1
          %s1101 = scalar_lea.sflag [#allocation6], %s1100
          %s1102 = sand.u32 %s255, 1
          %s1103 = smul.addr %s1102, 16
          %s1104 = scalar_lea.vmem [#allocation13], %s1103
          %1105 = dma.done %s1101, 256
        $region96: #{tpu_custom_call.1} parent=91 // pred_fallthru
          _
      $region92: #{tpu_custom_call.1} parent=5 // pred_fallthru
        _
    $region6: #{tpu_custom_call.1} parent=1 // loop_footer
      %s26 = sadd.s32 1, %s22
    $region7: #{tpu_custom_call.1} parent=1 // loop_footer_branch
      %21 = sbr.rel target = $region3
    $region8: #{tpu_custom_call.1} parent=1 // loop_exit
      _
    %1106 = vsyncpa [#allocation5], 1
    %s1107 = scalar_lea.sflag [#allocation5], 1
    %1108 = vsyncpa %s1107, 1
    %1109 = vsyncpa [#allocation8], 1
    %s1110 = scalar_lea.sflag [#allocation8], 1
    %1111 = vsyncpa %s1110, 1
    %1112 = vsyncpa [#allocation6], 1
    %s1113 = scalar_lea.sflag [#allocation6], 1
    %1114 = vsyncpa %s1113, 1
    %1115 = vsyncpa [#allocation12], 1

// kernel: tpu_custom_call.1
$region0: #{tpu_custom_call.1}
  #allocation0 [shape = 'u32[]', space=smem, size = 0x4, offset = 0x4, fixed_abs, tag = 'smem constant byte address 0x4 - core index']
  #allocation1 [shape = 'u32[144,128]{1,0:T(1,128)}', space=vmem, size = 0x12000, scoped, tag = 'internal scratch']
  #allocation2 [shape = 'f32[8,256]{1,0:T(8,128)}', space=vmem, size = 0x2000, scoped, tag = 'scratch operand']
  #allocation3 [shape = 'bf16[8,256]{1,0:T(8,128)(2,1)}', space=vmem, size = 0x1000, scoped, tag = 'scratch operand']
  %s0 = inlined_call_operand.hbm [shape: bf16[8,256], index: 0, kind: input, shape index: {}]
  %s1 = inlined_call_operand.hbm [shape: bf16[256,256], index: 1, kind: input, shape index: {}]
  %s2 = inlined_call_operand.vmem [shape: f32[1,256], index: 2, kind: input, shape index: {}]
  %s3 = inlined_call_operand.hbm [shape: bf16[256,256], index: 3, kind: input, shape index: {}]
  %s4 = inlined_call_operand.vmem [shape: f32[1,256], index: 4, kind: input, shape index: {}]
  %s5 = inlined_call_operand.hbm [shape: f32[8,128], index: 5, kind: output, shape index: {0}]
  %s6 = inlined_call_operand.hbm [shape: f32[8,128], index: 6, kind: output, shape index: {1}]
  %s7 = inlined_call_operand.hbm [shape: f32[8,256], index: 7, kind: output, shape index: {2}]
  %8 = xla_tuple %s5, %s6, %s7
  %s9 = sld [smem:[#allocation0]]
  $region97: #{tpu_custom_call.1} parent=0
    _
  %s11 = ssub.s32 1, %s9
  %s12 = scalar_select 0, %s11, %s9
  $region1: #{tpu_custom_call.1} parent=0
    #allocation4 [shape = 'u8[8192]{0}', space=vmem, size = 0x2000, scoped, tag = 'input window, operand 0']
    #allocation5 [shape = 's32[2]{0}', space=sflag, size = 0x8, scoped, tag = 'scoped memory for tpu_custom_call.1']
    #allocation6 [shape = 's32[2]{0}', space=sflag, size = 0x8, scoped, tag = 'scoped memory for tpu_custom_call.1']
    #allocation7 [shape = 'u8[262144]{0}', space=vmem, size = 0x40000, scoped, tag = 'input window, operand 1']
    #allocation8 [shape = 's32[2]{0}', space=sflag, size = 0x8, scoped, tag = 'scoped memory for tpu_custom_call.1']
    #allocation9 [shape = 'u8[262144]{0}', space=vmem, size = 0x40000, scoped, tag = 'input window, operand 3']
    #allocation10 [shape = 'u8[4096]{0}', space=vmem, size = 0x1000, scoped, tag = 'output window, operand 0, single buffered']
    #allocation11 [shape = 'u8[4096]{0}', space=vmem, size = 0x1000, scoped, tag = 'output window, operand 1, single buffered']
    #allocation12 [shape = 's32[1]{0}', space=sflag, size = 0x4, scoped, tag = 'scoped memory for tpu_custom_call.1']
    #allocation13 [shape = 'u8[16384]{0}', space=vmem, size = 0x4000, scoped, tag = 'output window, operand 2']
    %13 = vsyncpa [#allocation5], 0
    %s14 = scalar_lea.sflag [#allocation5], 1
    %15 = vsyncpa %s14, 0
    %16 = vsyncpa [#allocation8], 0
    %s17 = scalar_lea.sflag [#allocation8], 1
    %18 = vsyncpa %s17, 0
    %19 = vsyncpa [#allocation6], 0
    %20 = vsyncpa [#allocation12], 0
    loop: start=0, step=1, limit=4
    $region2: #{tpu_custom_call.1} parent=1 // loop_pre_header
      _
    $region3: #{tpu_custom_call.1} parent=1 // loop_header
      %s22 = sphi 0, %s26
      %p23 = scmp.ge.s32.totalorder %s22, 4
      %s29 = sphi 0, %s41
      %s30 = sphi 0, %s37
      %s31 = sphi 0, %s29
      %s32 = sphi 0, %s30
      %s33 = sphi 0, %s31
      %s34 = sphi 0, %s32
      %s50 = sphi 0, %s52
      %s53 = sphi 0, %s50
      %s54 = sphi 0, %s53
      %s70 = sphi 0, %s54
      %s80 = sphi 0, %s82
      %s83 = sphi 0, %s80
      %s84 = sphi 0, %s83
      %s100 = sphi 0, %s84
      %s104 = sphi 0, %s104
      %s106 = sphi 0, %s104
      %s107 = sphi 0, %s106
      %s121 = sphi 0, %s107
      %s133 = sphi 0, %s135
      %s136 = sphi 0, %s133
      %s137 = sphi 0, %s136
      %s153 = sphi 0, %s137
      %s165 = sphi 0, %s167
      %s168 = sphi 0, %s165
      %s169 = sphi 0, %s168
      %s185 = sphi 0, %s169
      %s191 = sphi 0, %s193
      %s194 = sphi 0, %s191
      %s195 = sphi 0, %s194
      %s211 = sphi 0, %s195
      %s217 = sphi 0, %s219
      %s220 = sphi 0, %s217
      %s221 = sphi 0, %s220
      %s237 = sphi 0, %s221
      %s251 = sphi 0, %s253
      %s254 = sphi 0, %s251
      %s255 = sphi 0, %s254
      %s271 = sphi 0, %s255
    $region4: #{tpu_custom_call.1} parent=1 // loop_header_branch
      %25 = sbr.rel (%p23) target = $region8
    $region5: #{tpu_custom_call.1} parent=1 // loop_body
      %s27 = ssub.s32 %s22, 1
      %s28 = ssub.s32 %s22, 2
      %s35 = sadd.s32 1, %s30
      %p36 = scmp.ge.s32.totalorder %s35, 2
      %s37 = scalar_select %p36, 0, %s35
      %s38 = sadd.s32 1, %s29
      %s39 = scalar_select %p36, %s38, %s29
      %p40 = scmp.ge.s32.totalorder %s39, 1
      %s41 = scalar_select %p40, 0, %s39
      %p42 = scmp.lt.s32.totalorder %s30, 0
      %s43 = scalar_select %p42, %s30, 0
      %p44 = scmp.lt.s32.totalorder %s37, 0
      %s45 = scalar_select %p44, %s37, 0
      %s46 = ssub.s32 %s29, %s41
      %s47 = ssub.s32 %s43, %s45
      %s48 = sor.u32 %s46, %s47
      %p49 = scmp.eq.s32.totalorder %s48, 0
      %s51 = sadd.s32 %s50, 1
      %s52 = scalar_select %p49, %s50, %s51
      %p55 = pneg %p49
      %p56 = scmp.eq.s32.totalorder %s22, 1
      %p57 = por %p55, %p56
      %p58 = scmp.ne.s32.totalorder %s50, %s53
      %p59 = scmp.eq.s32.totalorder %s22, 0
      %p60 = por %p58, %p59
      %p61 = scmp.ne.s32.totalorder %s50, %s53
      %p62 = scmp.eq.s32.totalorder %s27, 1
      %p63 = por %p61, %p62
      %p64 = scmp.ne.s32.totalorder %s53, %s54
      %p65 = scmp.eq.s32.totalorder %s27, 0
      %p66 = por %p64, %p65
      %p67 = scmp.ne.s32.totalorder %s53, %s54
      %p68 = scmp.eq.s32.totalorder %s28, 1
      %p69 = por %p67, %p68
      %p71 = scmp.ne.s32.totalorder %s54, %s70
      %p72 = scmp.eq.s32.totalorder %s28, 0
      %p73 = por %p71, %p72
      %p74 = scmp.lt.s32.totalorder %s30, 0
      %s75 = scalar_select %p74, %s30, 0
      %p76 = scmp.lt.s32.totalorder %s37, 0
      %s77 = scalar_select %p76, %s37, 0
      %s78 = ssub.s32 %s75, %s77
      %p79 = scmp.eq.s32.totalorder %s78, 0
      %s81 = sadd.s32 %s80, 1
      %s82 = scalar_select %p79, %s80, %s81
      %p85 = pneg %p79
      %p86 = scmp.eq.s32.totalorder %s22, 1
      %p87 = por %p85, %p86
      %p88 = scmp.ne.s32.totalorder %s80, %s83
      %p89 = scmp.eq.s32.totalorder %s22, 0
      %p90 = por %p88, %p89
      %p91 = scmp.ne.s32.totalorder %s80, %s83
      %p92 = scmp.eq.s32.totalorder %s27, 1
      %p93 = por %p91, %p92
      %p94 = scmp.ne.s32.totalorder %s83, %s84
      %p95 = scmp.eq.s32.totalorder %s27, 0
      %p96 = por %p94, %p95
      %p97 = scmp.ne.s32.totalorder %s83, %s84
      %p98 = scmp.eq.s32.totalorder %s28, 1
      %p99 = por %p97, %p98
      %p101 = scmp.ne.s32.totalorder %s84, %s100
      %p102 = scmp.eq.s32.totalorder %s28, 0
      %p103 = por %p101, %p102
      %s105 = sadd.s32 %s104, 1
      %p108 = scmp.eq.s32.totalorder %s22, 1
      %p109 = scmp.ne.s32.totalorder %s104, %s106
      %p110 = scmp.eq.s32.totalorder %s22, 0
      %p111 = por %p109, %p110
      %p112 = scmp.ne.s32.totalorder %s104, %s106
      %p113 = scmp.eq.s32.totalorder %s27, 1
      %p114 = por %p112, %p113
      %p115 = scmp.ne.s32.totalorder %s106, %s107
      %p116 = scmp.eq.s32.totalorder %s27, 0
      %p117 = por %p115, %p116
      %p118 = scmp.ne.s32.totalorder %s106, %s107
      %p119 = scmp.eq.s32.totalorder %s28, 1
      %p120 = por %p118, %p119
      %p122 = scmp.ne.s32.totalorder %s107, %s121
      %p123 = scmp.eq.s32.totalorder %s28, 0
      %p124 = por %p122, %p123
      %s125 = ssub.s32 %s30, 1
      %p126 = scmp.gt.s32.totalorder %s125, 0
      %s127 = scalar_select %p126, %s125, 0
      %s128 = ssub.s32 %s37, 1
      %p129 = scmp.gt.s32.totalorder %s128, 0
      %s130 = scalar_select %p129, %s128, 0
      %s131 = ssub.s32 %s127, %s130
      %p132 = scmp.eq.s32.totalorder %s131, 0
      %s134 = sadd.s32 %s133, 1
      %s135 = scalar_select %p132, %s133, %s134
      %p138 = pneg %p132
      %p139 = scmp.eq.s32.totalorder %s22, 1
      %p140 = por %p138, %p139
      %p141 = scmp.ne.s32.totalorder %s133, %s136
      %p142 = scmp.eq.s32.totalorder %s22, 0
      %p143 = por %p141, %p142
      %p144 = scmp.ne.s32.totalorder %s133, %s136
      %p145 = scmp.eq.s32.totalorder %s27, 1
      %p146 = por %p144, %p145
      %p147 = scmp.ne.s32.totalorder %s136, %s137
      %p148 = scmp.eq.s32.totalorder %s27, 0
      %p149 = por %p147, %p148
      %p150 = scmp.ne.s32.totalorder %s136, %s137
      %p151 = scmp.eq.s32.totalorder %s28, 1
      %p152 = por %p150, %p151
      %p154 = scmp.ne.s32.totalorder %s137, %s153
      %p155 = scmp.eq.s32.totalorder %s28, 0
      %p156 = por %p154, %p155
      %s157 = ssub.s32 %s30, 1
      %p158 = scmp.gt.s32.totalorder %s157, 0
      %s159 = scalar_select %p158, %s157, 0
      %s160 = ssub.s32 %s37, 1
      %p161 = scmp.gt.s32.totalorder %s160, 0
      %s162 = scalar_select %p161, %s160, 0
      %s163 = ssub.s32 %s159, %s162
      %p164 = scmp.eq.s32.totalorder %s163, 0
      %s166 = sadd.s32 %s165, 1
      %s167 = scalar_select %p164, %s165, %s166
      %p170 = pneg %p164
      %p171 = scmp.eq.s32.totalorder %s22, 1
      %p172 = por %p170, %p171
      %p173 = scmp.ne.s32.totalorder %s165, %s168
      %p174 = scmp.eq.s32.totalorder %s22, 0
      %p175 = por %p173, %p174
      %p176 = scmp.ne.s32.totalorder %s165, %s168
      %p177 = scmp.eq.s32.totalorder %s27, 1
      %p178 = por %p176, %p177
      %p179 = scmp.ne.s32.totalorder %s168, %s169
      %p180 = scmp.eq.s32.totalorder %s27, 0
      %p181 = por %p179, %p180
      %p182 = scmp.ne.s32.totalorder %s168, %s169
      %p183 = scmp.eq.s32.totalorder %s28, 1
      %p184 = por %p182, %p183
      %p186 = scmp.ne.s32.totalorder %s169, %s185
      %p187 = scmp.eq.s32.totalorder %s28, 0
      %p188 = por %p186, %p187
      %s189 = ssub.s32 %s29, %s41
      %p190 = scmp.eq.s32.totalorder %s189, 0
      %s192 = sadd.s32 %s191, 1
      %s193 = scalar_select %p190, %s191, %s192
      %p196 = pneg %p190
      %p197 = scmp.eq.s32.totalorder %s22, 1
      %p198 = por %p196, %p197
      %p199 = scmp.ne.s32.totalorder %s191, %s194
      %p200 = scmp.eq.s32.totalorder %s22, 0
      %p201 = por %p199, %p200
      %p202 = scmp.ne.s32.totalorder %s191, %s194
      %p203 = scmp.eq.s32.totalorder %s27, 1
      %p204 = por %p202, %p203
      %p205 = scmp.ne.s32.totalorder %s194, %s195
      %p206 = scmp.eq.s32.totalorder %s27, 0
      %p207 = por %p205, %p206
      %p208 = scmp.ne.s32.totalorder %s194, %s195
      %p209 = scmp.eq.s32.totalorder %s28, 1
      %p210 = por %p208, %p209
      %p212 = scmp.ne.s32.totalorder %s195, %s211
      %p213 = scmp.eq.s32.totalorder %s28, 0
      %p214 = por %p212, %p213
      %s215 = ssub.s32 %s29, %s41
      %p216 = scmp.eq.s32.totalorder %s215, 0
      %s218 = sadd.s32 %s217, 1
      %s219 = scalar_select %p216, %s217, %s218
      %p222 = pneg %p216
      %p223 = scmp.eq.s32.totalorder %s22, 1
      %p224 = por %p222, %p223
      %p225 = scmp.ne.s32.totalorder %s217, %s220
      %p226 = scmp.eq.s32.totalorder %s22, 0
      %p227 = por %p225, %p226
      %p228 = scmp.ne.s32.totalorder %s217, %s220
      %p229 = scmp.eq.s32.totalorder %s27, 1
      %p230 = por %p228, %p229
      %p231 = scmp.ne.s32.totalorder %s220, %s221
      %p232 = scmp.eq.s32.totalorder %s27, 0
      %p233 = por %p231, %p232
      %p234 = scmp.ne.s32.totalorder %s220, %s221
      %p235 = scmp.eq.s32.totalorder %s28, 1
      %p236 = por %p234, %p235
      %p238 = scmp.ne.s32.totalorder %s221, %s237
      %p239 = scmp.eq.s32.totalorder %s28, 0
      %p240 = por %p238, %p239
      %s241 = ssub.s32 %s30, 1
      %p242 = scmp.gt.s32.totalorder %s241, 0
      %s243 = scalar_select %p242, %s241, 0
      %s244 = ssub.s32 %s37, 1
      %p245 = scmp.gt.s32.totalorder %s244, 0
      %s246 = scalar_select %p245, %s244, 0
      %s247 = ssub.s32 %s29, %s41
      %s248 = ssub.s32 %s243, %s246
      %s249 = sor.u32 %s247, %s248
      %p250 = scmp.eq.s32.totalorder %s249, 0
      %s252 = sadd.s32 %s251, 1
      %s253 = scalar_select %p250, %s251, %s252
      %p256 = pneg %p250
      %p257 = scmp.eq.s32.totalorder %s22, 1
      %p258 = por %p256, %p257
      %p259 = scmp.ne.s32.totalorder %s251, %s254
      %p260 = scmp.eq.s32.totalorder %s22, 0
      %p261 = por %p259, %p260
      %p262 = scmp.ne.s32.totalorder %s251, %s254
      %p263 = scmp.eq.s32.totalorder %s27, 1
      %p264 = por %p262, %p263
      %p265 = scmp.ne.s32.totalorder %s254, %s255
      %p266 = scmp.eq.s32.totalorder %s27, 0
      %p267 = por %p265, %p266
      %p268 = scmp.ne.s32.totalorder %s254, %s255
      %p269 = scmp.eq.s32.totalorder %s28, 1
      %p270 = por %p268, %p269
      %p272 = scmp.ne.s32.totalorder %s255, %s271
      %p273 = scmp.eq.s32.totalorder %s28, 0
      %p274 = por %p272, %p273
      %p275 = scmp.le.s32.totalorder 1, %s22
      %p276 = scmp.lt.s32.totalorder %s22, 3
      %p277 = pnand %p275, %p276
      %p278 = pneg %p277
      // Predicated region
      $region9: #{tpu_custom_call.1} parent=5 // pred_check
        _
      $region10: #{tpu_custom_call.1} parent=5 // pred_check_branch
        %280 = sbr.rel (%p277) target = $region12
      $region11: #{tpu_custom_call.1} parent=5 // pred_region
        %s281 = ssub.s32 %s22, 1
        // Predicated region
        $region13: #{tpu_custom_call.1} parent=11 // pred_check
          %p282 = pneg %p117
        $region14: #{tpu_custom_call.1} parent=11 // pred_check_branch
          %284 = sbr.rel (%p282) target = $region16
        $region15: #{tpu_custom_call.1} parent=11 // pred_region
          _
        $region16: #{tpu_custom_call.1} parent=11 // pred_fallthru
          _
      $region12: #{tpu_custom_call.1} parent=5 // pred_fallthru
        _
      %p285 = scmp.lt.s32.totalorder %s22, 2
      // Predicated region
      $region17: #{tpu_custom_call.1} parent=5 // pred_check
        %p286 = pneg %p285
      $region18: #{tpu_custom_call.1} parent=5 // pred_check_branch
        %288 = sbr.rel (%p286) target = $region20
      $region19: #{tpu_custom_call.1} parent=5 // pred_region
        // Predicated region
        $region21: #{tpu_custom_call.1} parent=19 // pred_check
          %p289 = pneg %p60
        $region22: #{tpu_custom_call.1} parent=19 // pred_check_branch
          %291 = sbr.rel (%p289) target = $region24
        $region23: #{tpu_custom_call.1} parent=19 // pred_region
          %s292 = sand.u32 %s50, 1
          %s293 = scalar_lea.sflag [#allocation5], %s292
          %s294 = sand.u32 %s50, 1
          %s295 = smul.addr %s294, 8
          %s296 = scalar_lea.vmem [#allocation4], %s295
          %p297 = scmp.lt.s32.totalorder %s30, 0
          %s298 = scalar_select %p297, %s30, 0
          %s299 = smul.u32 2, %s298
          %s301 = ssub.s32 128, 128
          %302 = vsyncadd %s293, %s301
          %s303 = smul.addr %s29, 2
          %s304 = sadd.s32 %s299, %s303
          %s305 = smul.addr %s304, 64
          %s306 = scalar_lea.hbm %s0, %s305
          %s308 = sshll.u32 %s296, 4
          %s309 = int_to_ptr.vmem [resolvable:$true] %s308
          %311 = dma.hbm_to_vmem [thread:$0]  %s306, 128, %s309, %s293
        $region24: #{tpu_custom_call.1} parent=19 // pred_fallthru
          _
        // Predicated region
        $region25: #{tpu_custom_call.1} parent=19 // pred_check
          %p312 = pneg %p90
        $region26: #{tpu_custom_call.1} parent=19 // pred_check_branch
          %314 = sbr.rel (%p312) target = $region28
        $region27: #{tpu_custom_call.1} parent=19 // pred_region
          %s315 = sand.u32 %s22, 1
          %s316 = scalar_lea.sflag [#allocation8], %s315
          %s317 = sand.u32 %s80, 1
          %s318 = smul.addr %s317, 256
          %s319 = scalar_lea.vmem [#allocation7], %s318
          %p320 = scmp.lt.s32.totalorder %s30, 0
          %s321 = scalar_select %p320, %s30, 0
          %s322 = smul.u32 32, %s321
          %s324 = ssub.s32 4096, 4096
          %325 = vsyncadd %s316, %s324
          %s326 = smul.addr %s322, 2
          %s327 = smul.addr %s326, 64
          %s328 = scalar_lea.hbm %s1, %s327
          %s329 = sshll.u32 %s319, 4
          %s330 = int_to_ptr.vmem [resolvable:$true] %s329
          %335 = dma.hbm_to_vmem [thread:$0]  %s328, 4096, %s330, %s316, 128, 128, 8
        $region28: #{tpu_custom_call.1} parent=19 // pred_fallthru
          _
        // Predicated region
        $region29: #{tpu_custom_call.1} parent=19 // pred_check
          %p336 = pneg %p143
        $region30: #{tpu_custom_call.1} parent=19 // pred_check_branch
          %338 = sbr.rel (%p336) target = $region32
        $region31: #{tpu_custom_call.1} parent=19 // pred_region
          %s339 = sand.u32 %s22, 1
          %s340 = scalar_lea.sflag [#allocation8], %s339
          %s341 = sand.u32 %s133, 1
          %s342 = smul.addr %s341, 256
          %s343 = scalar_lea.vmem [#allocation9], %s342
          %s344 = ssub.s32 %s30, 1
          %p345 = scmp.gt.s32.totalorder %s344, 0
          %s346 = scalar_select %p345, %s344, 0
          %s347 = smul.u32 2, %s346
          %s349 = ssub.s32 4096, 4096
          %350 = vsyncadd %s340, %s349
          %s351 = smul.addr %s347, 64
          %s352 = scalar_lea.hbm %s3, %s351
          %s353 = sshll.u32 %s343, 4
          %s354 = int_to_ptr.vmem [resolvable:$true] %s353
          %359 = dma.hbm_to_vmem [thread:$0]  %s352, 4096, %s354, %s340, 128, 128, 8
        $region32: #{tpu_custom_call.1} parent=19 // pred_fallthru
          _
        // Predicated region
        $region33: #{tpu_custom_call.1} parent=19 // pred_check
          %p360 = pneg %p175
        $region34: #{tpu_custom_call.1} parent=19 // pred_check_branch
          %362 = sbr.rel (%p360) target = $region36
        $region35: #{tpu_custom_call.1} parent=19 // pred_region
          %s363 = ssub.s32 %s30, 1
          %p364 = scmp.gt.s32.totalorder %s363, 0
          %s365 = scalar_select %p364, %s363, 0
          %s366 = smul.u32 2, %s365
          %p367 = scmp.lt.s32.totalorder %s366, 1
          %s368 = scalar_select %p367, %s366, 1
          %s369 = scalar_lea.vmem %s4, %s368
          %s370 = ssub.s32 %s30, 1
          %p371 = scmp.gt.s32.totalorder %s370, 0
          %s372 = scalar_select %p371, %s370, 0
          %s373 = smul.u32 2, %s372
        $region36: #{tpu_custom_call.1} parent=19 // pred_fallthru
          _
      $region20: #{tpu_custom_call.1} parent=5 // pred_fallthru
        _
      %p374 = scmp.le.s32.totalorder 1, %s22
      %p375 = scmp.lt.s32.totalorder %s22, 3
      %p376 = pnand %p374, %p375
      %p377 = pneg %p376
      // Predicated region
      $region37: #{tpu_custom_call.1} parent=5 // pred_check
        _
      $region38: #{tpu_custom_call.1} parent=5 // pred_check_branch
        %379 = sbr.rel (%p376) target = $region40
      $region39: #{tpu_custom_call.1} parent=5 // pred_region
        %s380 = ssub.s32 %s22, 1
        %s381 = sand.u32 %s53, 1
        %s382 = scalar_lea.sflag [#allocation5], %s381
        %s383 = sand.u32 %s53, 1
        %s384 = smul.addr %s383, 8
        %s385 = scalar_lea.vmem [#allocation4], %s384
        // Predicated region
        $region41: #{tpu_custom_call.1} parent=39 // pred_check
          %p386 = pneg %p66
        $region42: #{tpu_custom_call.1} parent=39 // pred_check_branch
          %388 = sbr.rel (%p386) target = $region44
        $region43: #{tpu_custom_call.1} parent=39 // pred_region
          %389 = dma.done %s382, 128
        $region44: #{tpu_custom_call.1} parent=39 // pred_fallthru
          _
        %s390 = sand.u32 %s27, 1
        %s391 = scalar_lea.sflag [#allocation8], %s390
        %s392 = sand.u32 %s83, 1
        %s393 = smul.addr %s392, 256
        %s394 = scalar_lea.vmem [#allocation7], %s393
        // Predicated region
        $region45: #{tpu_custom_call.1} parent=39 // pred_check
          %p395 = pneg %p96
        $region46: #{tpu_custom_call.1} parent=39 // pred_check_branch
          %397 = sbr.rel (%p395) target = $region48
        $region47: #{tpu_custom_call.1} parent=39 // pred_region
          %398 = dma.done %s391, 4096
        $region48: #{tpu_custom_call.1} parent=39 // pred_fallthru
          _
        %s399 = sand.u32 %s27, 1
        %s400 = scalar_lea.sflag [#allocation8], %s399
        %s401 = sand.u32 %s136, 1
        %s402 = smul.addr %s401, 256
        %s403 = scalar_lea.vmem [#allocation9], %s402
        // Predicated region
        $region49: #{tpu_custom_call.1} parent=39 // pred_check
          %p404 = pneg %p149
        $region50: #{tpu_custom_call.1} parent=39 // pred_check_branch
          %406 = sbr.rel (%p404) target = $region52
        $region51: #{tpu_custom_call.1} parent=39 // pred_region
          %407 = dma.done %s400, 4096
        $region52: #{tpu_custom_call.1} parent=39 // pred_fallthru
          _
        %s408 = sand.u32 %s53, 1
        %s409 = scalar_lea.sflag [#allocation5], %s408
        %s410 = sand.u32 %s53, 1
        %s411 = smul.addr %s410, 8
        %s412 = scalar_lea.vmem [#allocation4], %s411
        %p413 = pneg %p66
        %p414 = pneg %p63
        %s415 = sand.u32 %s27, 1
        %s416 = scalar_lea.sflag [#allocation8], %s415
        %s417 = sand.u32 %s83, 1
        %s418 = smul.addr %s417, 256
        %s419 = scalar_lea.vmem [#allocation7], %s418
        %p420 = pneg %p96
        %p421 = pneg %p93
        %p422 = pneg %p117
        %p423 = pneg %p114
        %s424 = sand.u32 %s27, 1
        %s425 = scalar_lea.sflag [#allocation8], %s424
        %s426 = sand.u32 %s136, 1
        %s427 = smul.addr %s426, 256
        %s428 = scalar_lea.vmem [#allocation9], %s427
        %p429 = pneg %p149
        %p430 = pneg %p146
        %s431 = ssub.s32 %s32, 1
        %p432 = scmp.gt.s32.totalorder %s431, 0
        %s433 = scalar_select %p432, %s431, 0
        %s434 = smul.u32 2, %s433
        %p435 = scmp.lt.s32.totalorder %s434, 1
        %s436 = scalar_select %p435, %s434, 1
        %s437 = scalar_lea.vmem %s4, %s436
        %p438 = pneg %p181
        %p439 = pneg %p178
        %p440 = pneg %p207
        %p441 = pneg %p204
        %p442 = pneg %p233
        %p443 = pneg %p230
        %p444 = pneg %p267
        %p445 = pneg %p264
        %s446 = sand.u32 %s27, 1
        %s447 = scalar_lea.sflag [#allocation6], %s446
        %s448 = sand.u32 %s254, 1
        %s449 = smul.addr %s448, 16
        %s450 = scalar_lea.vmem [#allocation13], %s449
        %p451 = scmp.lt.s32.totalorder %s32, 0
        %s452 = scalar_select %p451, %s32, 0
        %s453 = smul.u32 2, %s452
        %p454 = scmp.lt.s32.totalorder %s32, 0
        %s455 = scalar_select %p454, %s32, 0
        %s456 = smul.u32 32, %s455
        %s457 = ssub.s32 %s32, 1
        %p458 = scmp.gt.s32.totalorder %s457, 0
        %s459 = scalar_select %p458, %s457, 0
        %s460 = smul.u32 2, %s459
        %s461 = ssub.s32 %s32, 1
        %p462 = scmp.gt.s32.totalorder %s461, 0
        %s463 = scalar_select %p462, %s461, 0
        %s464 = smul.u32 2, %s463
        %p465 = scmp.lt.s32.totalorder %s464, 1
        %s466 = scalar_select %p465, %s464, 1
        %s467 = scalar_lea.vmem %s4, %s466
        %s468 = ssub.s32 %s32, 1
        %p469 = scmp.gt.s32.totalorder %s468, 0
        %s470 = scalar_select %p469, %s468, 0
        %s471 = smul.u32 2, %s470
        %s472 = ssub.s32 %s32, 1
        %p473 = scmp.gt.s32.totalorder %s472, 0
        %s474 = scalar_select %p473, %s472, 0
        %s475 = smul.u32 2, %s474
        %p476 = scmp.lt.s32.totalorder %s32, 1
        %p477 = scmp.eq.s32.totalorder %s32, 0
        // Predicated region
        $region53: #{tpu_custom_call.1} parent=39 // pred_check
          %p478 = pneg %p477
        $region54: #{tpu_custom_call.1} parent=39 // pred_check_branch
          %480 = sbr.rel (%p478) target = $region56
        $region55: #{tpu_custom_call.1} parent=39 // pred_region
          %481 = vst [vmem:[#allocation2] sm:$0xff] 0.0
          %482 = vst [vmem:[#allocation2 + $0x8] sm:$0xff] 0.0
        $region56: #{tpu_custom_call.1} parent=39 // pred_fallthru
          _
        // Predicated region
        $region57: #{tpu_custom_call.1} parent=39 // pred_check
          %p483 = pneg %p476
        $region58: #{tpu_custom_call.1} parent=39 // pred_check_branch
          %485 = sbr.rel (%p483) target = $region60
        $region59: #{tpu_custom_call.1} parent=39 // pred_region
          %v486 = vld [vmem:[#allocation2] sm:$0xff]
          %v487 = vld [vmem:[#allocation2 + $0x8] sm:$0xff]
          %v488 = vld [vmem:[%s385] sm:$0xff]
          %v489 = vld [vmem:[%s394] sm:$0xff]
          %v490 = vld [vmem:[%s394 + $0x8] sm:$0xff]
          %v491 = vld [vmem:[%s394 + $0x10] sm:$0xff]
          %v492 = vld [vmem:[%s394 + $0x18] sm:$0xff]
          %v493 = vld [vmem:[%s394 + $0x20] sm:$0xff]
          %v494 = vld [vmem:[%s394 + $0x28] sm:$0xff]
          %v495 = vld [vmem:[%s394 + $0x30] sm:$0xff]
          %v496 = vld [vmem:[%s394 + $0x38] sm:$0xff]
          %v497 = vld [vmem:[%s394 + $0x40] sm:$0xff]
          %v498 = vld [vmem:[%s394 + $0x48] sm:$0xff]
          %v499 = vld [vmem:[%s394 + $0x50] sm:$0xff]
          %v500 = vld [vmem:[%s394 + $0x58] sm:$0xff]
          %v501 = vld [vmem:[%s394 + $0x60] sm:$0xff]
          %v502 = vld [vmem:[%s394 + $0x68] sm:$0xff]
          %v503 = vld [vmem:[%s394 + $0x70] sm:$0xff]
          %v504 = vld [vmem:[%s394 + $0x78] sm:$0xff]
          %v505 = vld [vmem:[%s394 + $0x80] sm:$0xff]
          %v506 = vld [vmem:[%s394 + $0x88] sm:$0xff]
          %v507 = vld [vmem:[%s394 + $0x90] sm:$0xff]
          %v508 = vld [vmem:[%s394 + $0x98] sm:$0xff]
          %v509 = vld [vmem:[%s394 + $0xa0] sm:$0xff]
          %v510 = vld [vmem:[%s394 + $0xa8] sm:$0xff]
          %v511 = vld [vmem:[%s394 + $0xb0] sm:$0xff]
          %v512 = vld [vmem:[%s394 + $0xb8] sm:$0xff]
          %v513 = vld [vmem:[%s394 + $0xc0] sm:$0xff]
          %v514 = vld [vmem:[%s394 + $0xc8] sm:$0xff]
          %v515 = vld [vmem:[%s394 + $0xd0] sm:$0xff]
          %v516 = vld [vmem:[%s394 + $0xd8] sm:$0xff]
          %v517 = vld [vmem:[%s394 + $0xe0] sm:$0xff]
          %v518 = vld [vmem:[%s394 + $0xe8] sm:$0xff]
          %v519 = vld [vmem:[%s394 + $0xf0] sm:$0xff]
          %v520 = vld [vmem:[%s394 + $0xf8] sm:$0xff]
          %v522 = vunpack.c.l.b16 %v488
          %v523 = vunpack.c.h.b16 %v488
          %v524 = vpack.c.b16 %v522, %v522
          %v525 = vpack.c.b16 %v523, %v523
          %v560 = vunpack.c.l.b16 %v489
          %v561 = vunpack.c.h.b16 %v489
          %v562 = vunpack.c.l.b16 %v490
          %v563 = vunpack.c.h.b16 %v490
          %v564 = vunpack.c.l.b16 %v491
          %v565 = vunpack.c.h.b16 %v491
          %v566 = vunpack.c.l.b16 %v492
          %v567 = vunpack.c.h.b16 %v492
          %v568 = vunpack.c.l.b16 %v493
          %v569 = vunpack.c.h.b16 %v493
          %v570 = vunpack.c.l.b16 %v494
          %v571 = vunpack.c.h.b16 %v494
          %v572 = vunpack.c.l.b16 %v495
          %v573 = vunpack.c.h.b16 %v495
          %v574 = vunpack.c.l.b16 %v496
          %v575 = vunpack.c.h.b16 %v496
          %v576 = vunpack.c.l.b16 %v497
          %v577 = vunpack.c.h.b16 %v497
          %v578 = vunpack.c.l.b16 %v498
          %v579 = vunpack.c.h.b16 %v498
          %v580 = vunpack.c.l.b16 %v499
          %v581 = vunpack.c.h.b16 %v499
          %v582 = vunpack.c.l.b16 %v500
          %v583 = vunpack.c.h.b16 %v500
          %v584 = vunpack.c.l.b16 %v501
          %v585 = vunpack.c.h.b16 %v501
          %v586 = vunpack.c.l.b16 %v502
          %v587 = vunpack.c.h.b16 %v502
          %v588 = vunpack.c.l.b16 %v503
          %v589 = vunpack.c.h.b16 %v503
          %v590 = vunpack.c.l.b16 %v504
          %v591 = vunpack.c.h.b16 %v504
          %v592 = vunpack.c.l.b16 %v505
          %v593 = vunpack.c.h.b16 %v505
          %v594 = vunpack.c.l.b16 %v506
          %v595 = vunpack.c.h.b16 %v506
          %v596 = vunpack.c.l.b16 %v507
          %v597 = vunpack.c.h.b16 %v507
          %v598 = vunpack.c.l.b16 %v508
          %v599 = vunpack.c.h.b16 %v508
          %v600 = vunpack.c.l.b16 %v509
          %v601 = vunpack.c.h.b16 %v509
          %v602 = vunpack.c.l.b16 %v510
          %v603 = vunpack.c.h.b16 %v510
          %v604 = vunpack.c.l.b16 %v511
          %v605 = vunpack.c.h.b16 %v511
          %v606 = vunpack.c.l.b16 %v512
          %v607 = vunpack.c.h.b16 %v512
          %v608 = vunpack.c.l.b16 %v513
          %v609 = vunpack.c.h.b16 %v513
          %v610 = vunpack.c.l.b16 %v514
          %v611 = vunpack.c.h.b16 %v514
          %v612 = vunpack.c.l.b16 %v515
          %v613 = vunpack.c.h.b16 %v515
          %v614 = vunpack.c.l.b16 %v516
          %v615 = vunpack.c.h.b16 %v516
          %v616 = vunpack.c.l.b16 %v517
          %v617 = vunpack.c.h.b16 %v517
          %v618 = vunpack.c.l.b16 %v518
          %v619 = vunpack.c.h.b16 %v518
          %v620 = vunpack.c.l.b16 %v519
          %v621 = vunpack.c.h.b16 %v519
          %v622 = vunpack.c.l.b16 %v520
          %v623 = vunpack.c.h.b16 %v520
          %v624 = vpack.c.b16 %v562, %v560
          %v625 = vpack.c.b16 %v563, %v561
          %v626 = vpack.c.b16 %v566, %v564
          %v627 = vpack.c.b16 %v567, %v565
          %v628 = vpack.c.b16 %v570, %v568
          %v629 = vpack.c.b16 %v571, %v569
          %v630 = vpack.c.b16 %v574, %v572
          %v631 = vpack.c.b16 %v575, %v573
          %v632 = vpack.c.b16 %v578, %v576
          %v633 = vpack.c.b16 %v579, %v577
          %v634 = vpack.c.b16 %v582, %v580
          %v635 = vpack.c.b16 %v583, %v581
          %v636 = vpack.c.b16 %v586, %v584
          %v637 = vpack.c.b16 %v587, %v585
          %v638 = vpack.c.b16 %v590, %v588
          %v639 = vpack.c.b16 %v591, %v589
          %v640 = vpack.c.b16 %v594, %v592
          %v641 = vpack.c.b16 %v595, %v593
          %v642 = vpack.c.b16 %v598, %v596
          %v643 = vpack.c.b16 %v599, %v597
          %v644 = vpack.c.b16 %v602, %v600
          %v645 = vpack.c.b16 %v603, %v601
          %v646 = vpack.c.b16 %v606, %v604
          %v647 = vpack.c.b16 %v607, %v605
          %v648 = vpack.c.b16 %v610, %v608
          %v649 = vpack.c.b16 %v611, %v609
          %v650 = vpack.c.b16 %v614, %v612
          %v651 = vpack.c.b16 %v615, %v613
          %v652 = vpack.c.b16 %v618, %v616
          %v653 = vpack.c.b16 %v619, %v617
          %v654 = vpack.c.b16 %v622, %v620
          %v655 = vpack.c.b16 %v623, %v621
          %688 = vmatprep.subr.bf16.mxu0 %v625
          %689 = vmatpush1.bf16.msra.mxu0 %v624
          %690 = vmatprep.subr.bf16.mxu0 %v627
          %691 = vmatpush1.bf16.msra.mxu0 %v626
          %692 = vmatprep.subr.bf16.mxu0 %v629
          %693 = vmatpush1.bf16.msra.mxu0 %v628
          %694 = vmatprep.subr.bf16.mxu0 %v631
          %695 = vmatpush1.bf16.msra.mxu0 %v630
          %696 = vmatprep.subr.bf16.mxu0 %v633
          %697 = vmatpush1.bf16.msra.mxu0 %v632
          %698 = vmatprep.subr.bf16.mxu0 %v635
          %699 = vmatpush1.bf16.msra.mxu0 %v634
          %700 = vmatprep.subr.bf16.mxu0 %v637
          %701 = vmatpush1.bf16.msra.mxu0 %v636
          %702 = vmatprep.subr.bf16.mxu0 %v639
          %703 = vmatpush1.bf16.msra.mxu0 %v638
          %704 = vmatprep.subr.bf16.mxu0 %v641
          %705 = vmatpush1.bf16.msra.mxu0 %v640
          %706 = vmatprep.subr.bf16.mxu0 %v643
          %707 = vmatpush1.bf16.msra.mxu0 %v642
          %708 = vmatprep.subr.bf16.mxu0 %v645
          %709 = vmatpush1.bf16.msra.mxu0 %v644
          %710 = vmatprep.subr.bf16.mxu0 %v647
          %711 = vmatpush1.bf16.msra.mxu0 %v646
          %712 = vmatprep.subr.bf16.mxu0 %v649
          %713 = vmatpush1.bf16.msra.mxu0 %v648
          %714 = vmatprep.subr.bf16.mxu0 %v651
          %715 = vmatpush1.bf16.msra.mxu0 %v650
          %716 = vmatprep.subr.bf16.mxu0 %v653
          %717 = vmatpush1.bf16.msra.mxu0 %v652
          %718 = vmatprep.subr.bf16.mxu0 %v655
          %719 = vmatpush1.bf16.msra.mxu0 %v654
          %720 = vmatprep.mubr.bf16.mxu0 %v525
          %721 = vmatmul.mubr.bf16.gmra.mrb[0].mxu0 %v524
          %v722 = vpop.f32.mrb[0].mxu0
          %v723 = vadd.f32 0.0, %v722
          %v724 = vpop.f32.mrb[0].mxu0
          %v725 = vadd.f32 0.0, %v724
          %v726 = vpop.f32.mrb[0].mxu0
          %v727 = vpop.f32.mrb[0].mxu0
          %728 = vdwg.mxu0
          %v729 = vadd.f32 %v486, %v723
          %v730 = vadd.f32 %v487, %v725
          %731 = vst [vmem:[#allocation2] sm:$0xff] %v729
          %732 = vst [vmem:[#allocation2 + $0x8] sm:$0xff] %v730
        $region60: #{tpu_custom_call.1} parent=39 // pred_fallthru
          _
        // Predicated region
        $region61: #{tpu_custom_call.1} parent=39 // pred_check
          %p733 = pneg %p477
        $region62: #{tpu_custom_call.1} parent=39 // pred_check_branch
          %735 = sbr.rel (%p733) target = $region64
        $region63: #{tpu_custom_call.1} parent=39 // pred_region
          %v736 = vld [vmem:[#allocation2] sm:$0xff]
          %v737 = vld [vmem:[#allocation2 + $0x8] sm:$0xff]
          %v738 = vld [vmem:[%s2] sm:$0x3]
          %v740 = vlaneseq
          %v741 = vshrl.u32 %v740, 7
          %v742 = vsub.s32 0, %v741
          %v743 = vrot.slane %v738, %v742
          %v744 = vlaneseq
          %v745 = vshrl.u32 %v744, 7
          %v746 = vsub.s32 1, %v745
          %v747 = vrot.slane %v738, %v746
          %v750 = vadd.f32 %v736, %v743
          %v751 = vadd.f32 %v737, %v747
          %v752 = vxor.u32 %v750, 2147483648
          %v753 = vxor.u32 %v751, 2147483648
          %v754 = vmul.f32 %v752, 1.442695
          %v755 = vpow.pop %v754
          %v756 = vmul.f32 %v753, 1.442695
          %v757 = vpow.pop %v756
          %v758 = vadd.f32 %v755, 1.0
          %v759 = vadd.f32 %v757, 1.0
          %v760 = vrcp.pop %v758
          %v761 = vmul.f32 1.0, %v760
          %v762 = vrcp.pop %v759
          %v763 = vmul.f32 1.0, %v762
          %v764 = vpack.c.bf16 %v761, %v761
          %v765 = vpack.c.bf16 %v763, %v763
          %v768 = vunpack.c.l.b16 %v764
          %v769 = vunpack.c.l.b16 %v765
          %v770 = vpack.c.b16 %v769, %v768
          %772 = vst [vmem:[#allocation3] sm:$0xff] %v770
          %773 = vst [vmem:[#allocation11] sm:$0xff] %v761
          %774 = vst [vmem:[#allocation10] sm:$0xff] %v763
        $region64: #{tpu_custom_call.1} parent=39 // pred_fallthru
          _
        %p775 = scmp.ge.s32.totalorder %s32, 1
        // Predicated region
        $region65: #{tpu_custom_call.1} parent=39 // pred_check
          %p776 = pneg %p775
        $region66: #{tpu_custom_call.1} parent=39 // pred_check_branch
          %778 = sbr.rel (%p776) target = $region68
        $region67: #{tpu_custom_call.1} parent=39 // pred_region
          %v779 = vld [vmem:[#allocation3] sm:$0xff]
          %v780 = vld [vmem:[%s403] sm:$0xff]
          %v781 = vld [vmem:[%s403 + $0x8] sm:$0xff]
          %v782 = vld [vmem:[%s403 + $0x10] sm:$0xff]
          %v783 = vld [vmem:[%s403 + $0x18] sm:$0xff]
          %v784 = vld [vmem:[%s403 + $0x20] sm:$0xff]
          %v785 = vld [vmem:[%s403 + $0x28] sm:$0xff]
          %v786 = vld [vmem:[%s403 + $0x30] sm:$0xff]
          %v787 = vld [vmem:[%s403 + $0x38] sm:$0xff]
          %v788 = vld [vmem:[%s403 + $0x40] sm:$0xff]
          %v789 = vld [vmem:[%s403 + $0x48] sm:$0xff]
          %v790 = vld [vmem:[%s403 + $0x50] sm:$0xff]
          %v791 = vld [vmem:[%s403 + $0x58] sm:$0xff]
          %v792 = vld [vmem:[%s403 + $0x60] sm:$0xff]
          %v793 = vld [vmem:[%s403 + $0x68] sm:$0xff]
          %v794 = vld [vmem:[%s403 + $0x70] sm:$0xff]
          %v795 = vld [vmem:[%s403 + $0x78] sm:$0xff]
          %v796 = vld [vmem:[%s403 + $0x80] sm:$0xff]
          %v797 = vld [vmem:[%s403 + $0x88] sm:$0xff]
          %v798 = vld [vmem:[%s403 + $0x90] sm:$0xff]
          %v799 = vld [vmem:[%s403 + $0x98] sm:$0xff]
          %v800 = vld [vmem:[%s403 + $0xa0] sm:$0xff]
          %v801 = vld [vmem:[%s403 + $0xa8] sm:$0xff]
          %v802 = vld [vmem:[%s403 + $0xb0] sm:$0xff]
          %v803 = vld [vmem:[%s403 + $0xb8] sm:$0xff]
          %v804 = vld [vmem:[%s403 + $0xc0] sm:$0xff]
          %v805 = vld [vmem:[%s403 + $0xc8] sm:$0xff]
          %v806 = vld [vmem:[%s403 + $0xd0] sm:$0xff]
          %v807 = vld [vmem:[%s403 + $0xd8] sm:$0xff]
          %v808 = vld [vmem:[%s403 + $0xe0] sm:$0xff]
          %v809 = vld [vmem:[%s403 + $0xe8] sm:$0xff]
          %v810 = vld [vmem:[%s403 + $0xf0] sm:$0xff]
          %v811 = vld [vmem:[%s403 + $0xf8] sm:$0xff]
          %v812 = vld [vmem:[%s467] sm:$0x3]
          %v814 = vlaneseq
          %v815 = vshrl.u32 %v814, 7
          %v816 = vsub.s32 0, %v815
          %v817 = vrot.slane %v812, %v816
          %v818 = vlaneseq
          %v819 = vshrl.u32 %v818, 7
          %v820 = vsub.s32 1, %v819
          %v821 = vrot.slane %v812, %v820
          %v825 = vunpack.c.l.b16 %v779
          %v826 = vunpack.c.h.b16 %v779
          %v827 = vpack.c.b16 %v825, %v825
          %v828 = vpack.c.b16 %v826, %v826
          %v863 = vunpack.c.l.b16 %v780
          %v864 = vunpack.c.h.b16 %v780
          %v865 = vunpack.c.l.b16 %v781
          %v866 = vunpack.c.h.b16 %v781
          %v867 = vunpack.c.l.b16 %v782
          %v868 = vunpack.c.h.b16 %v782
          %v869 = vunpack.c.l.b16 %v783
          %v870 = vunpack.c.h.b16 %v783
          %v871 = vunpack.c.l.b16 %v784
          %v872 = vunpack.c.h.b16 %v784
          %v873 = vunpack.c.l.b16 %v785
          %v874 = vunpack.c.h.b16 %v785
          %v875 = vunpack.c.l.b16 %v786
          %v876 = vunpack.c.h.b16 %v786
          %v877 = vunpack.c.l.b16 %v787
          %v878 = vunpack.c.h.b16 %v787
          %v879 = vunpack.c.l.b16 %v788
          %v880 = vunpack.c.h.b16 %v788
          %v881 = vunpack.c.l.b16 %v789
          %v882 = vunpack.c.h.b16 %v789
          %v883 = vunpack.c.l.b16 %v790
          %v884 = vunpack.c.h.b16 %v790
          %v885 = vunpack.c.l.b16 %v791
          %v886 = vunpack.c.h.b16 %v791
          %v887 = vunpack.c.l.b16 %v792
          %v888 = vunpack.c.h.b16 %v792
          %v889 = vunpack.c.l.b16 %v793
          %v890 = vunpack.c.h.b16 %v793
          %v891 = vunpack.c.l.b16 %v794
          %v892 = vunpack.c.h.b16 %v794
          %v893 = vunpack.c.l.b16 %v795
          %v894 = vunpack.c.h.b16 %v795
          %v895 = vunpack.c.l.b16 %v796
          %v896 = vunpack.c.h.b16 %v796
          %v897 = vunpack.c.l.b16 %v797
          %v898 = vunpack.c.h.b16 %v797
          %v899 = vunpack.c.l.b16 %v798
          %v900 = vunpack.c.h.b16 %v798
          %v901 = vunpack.c.l.b16 %v799
          %v902 = vunpack.c.h.b16 %v799
          %v903 = vunpack.c.l.b16 %v800
          %v904 = vunpack.c.h.b16 %v800
          %v905 = vunpack.c.l.b16 %v801
          %v906 = vunpack.c.h.b16 %v801
          %v907 = vunpack.c.l.b16 %v802
          %v908 = vunpack.c.h.b16 %v802
          %v909 = vunpack.c.l.b16 %v803
          %v910 = vunpack.c.h.b16 %v803
          %v911 = vunpack.c.l.b16 %v804
          %v912 = vunpack.c.h.b16 %v804
          %v913 = vunpack.c.l.b16 %v805
          %v914 = vunpack.c.h.b16 %v805
          %v915 = vunpack.c.l.b16 %v806
          %v916 = vunpack.c.h.b16 %v806
          %v917 = vunpack.c.l.b16 %v807
          %v918 = vunpack.c.h.b16 %v807
          %v919 = vunpack.c.l.b16 %v808
          %v920 = vunpack.c.h.b16 %v808
          %v921 = vunpack.c.l.b16 %v809
          %v922 = vunpack.c.h.b16 %v809
          %v923 = vunpack.c.l.b16 %v810
          %v924 = vunpack.c.h.b16 %v810
          %v925 = vunpack.c.l.b16 %v811
          %v926 = vunpack.c.h.b16 %v811
          %v927 = vpack.c.b16 %v865, %v863
          %v928 = vpack.c.b16 %v866, %v864
          %v929 = vpack.c.b16 %v869, %v867
          %v930 = vpack.c.b16 %v870, %v868
          %v931 = vpack.c.b16 %v873, %v871
          %v932 = vpack.c.b16 %v874, %v872
          %v933 = vpack.c.b16 %v877, %v875
          %v934 = vpack.c.b16 %v878, %v876
          %v935 = vpack.c.b16 %v881, %v879
          %v936 = vpack.c.b16 %v882, %v880
          %v937 = vpack.c.b16 %v885, %v883
          %v938 = vpack.c.b16 %v886, %v884
          %v939 = vpack.c.b16 %v889, %v887
          %v940 = vpack.c.b16 %v890, %v888
          %v941 = vpack.c.b16 %v893, %v891
          %v942 = vpack.c.b16 %v894, %v892
          %v943 = vpack.c.b16 %v897, %v895
          %v944 = vpack.c.b16 %v898, %v896
          %v945 = vpack.c.b16 %v901, %v899
          %v946 = vpack.c.b16 %v902, %v900
          %v947 = vpack.c.b16 %v905, %v903
          %v948 = vpack.c.b16 %v906, %v904
          %v949 = vpack.c.b16 %v909, %v907
          %v950 = vpack.c.b16 %v910, %v908
          %v951 = vpack.c.b16 %v913, %v911
          %v952 = vpack.c.b16 %v914, %v912
          %v953 = vpack.c.b16 %v917, %v915
          %v954 = vpack.c.b16 %v918, %v916
          %v955 = vpack.c.b16 %v921, %v919
          %v956 = vpack.c.b16 %v922, %v920
          %v957 = vpack.c.b16 %v925, %v923
          %v958 = vpack.c.b16 %v926, %v924
          %991 = vmatprep.subr.bf16.mxu0 %v928
          %992 = vmatpush1.bf16.msra.mxu0 %v927
          %993 = vmatprep.subr.bf16.mxu0 %v930
          %994 = vmatpush1.bf16.msra.mxu0 %v929
          %995 = vmatprep.subr.bf16.mxu0 %v932
          %996 = vmatpush1.bf16.msra.mxu0 %v931
          %997 = vmatprep.subr.bf16.mxu0 %v934
          %998 = vmatpush1.bf16.msra.mxu0 %v933
          %999 = vmatprep.subr.bf16.mxu0 %v936
          %1000 = vmatpush1.bf16.msra.mxu0 %v935
          %1001 = vmatprep.subr.bf16.mxu0 %v938
          %1002 = vmatpush1.bf16.msra.mxu0 %v937
          %1003 = vmatprep.subr.bf16.mxu0 %v940
          %1004 = vmatpush1.bf16.msra.mxu0 %v939
          %1005 = vmatprep.subr.bf16.mxu0 %v942
          %1006 = vmatpush1.bf16.msra.mxu0 %v941
          %1007 = vmatprep.subr.bf16.mxu0 %v944
          %1008 = vmatpush1.bf16.msra.mxu0 %v943
          %1009 = vmatprep.subr.bf16.mxu0 %v946
          %1010 = vmatpush1.bf16.msra.mxu0 %v945
          %1011 = vmatprep.subr.bf16.mxu0 %v948
          %1012 = vmatpush1.bf16.msra.mxu0 %v947
          %1013 = vmatprep.subr.bf16.mxu0 %v950
          %1014 = vmatpush1.bf16.msra.mxu0 %v949
          %1015 = vmatprep.subr.bf16.mxu0 %v952
          %1016 = vmatpush1.bf16.msra.mxu0 %v951
          %1017 = vmatprep.subr.bf16.mxu0 %v954
          %1018 = vmatpush1.bf16.msra.mxu0 %v953
          %1019 = vmatprep.subr.bf16.mxu0 %v956
          %1020 = vmatpush1.bf16.msra.mxu0 %v955
          %1021 = vmatprep.subr.bf16.mxu0 %v958
          %1022 = vmatpush1.bf16.msra.mxu0 %v957
          %1023 = vmatprep.mubr.bf16.mxu0 %v828
          %1024 = vmatmul.mubr.bf16.gmra.mrb[0].mxu0 %v827
          %v1025 = vpop.f32.mrb[0].mxu0
          %v1026 = vadd.f32 %v817, %v1025
          %v1027 = vpop.f32.mrb[0].mxu0
          %v1028 = vadd.f32 %v821, %v1027
          %v1029 = vpop.f32.mrb[0].mxu0
          %v1030 = vpop.f32.mrb[0].mxu0
          %1031 = vdwg.mxu0
          %1032 = vst [vmem:[%s450] sm:$0xff] %v1026
          %1033 = vst [vmem:[%s450 + $0x8] sm:$0xff] %v1028
        $region68: #{tpu_custom_call.1} parent=39 // pred_fallthru
          _
        %s1034 = sand.u32 %s27, 1
        %s1035 = scalar_lea.sflag [#allocation6], %s1034
        %s1036 = sand.u32 %s254, 1
        %s1037 = smul.addr %s1036, 16
        %s1038 = scalar_lea.vmem [#allocation13], %s1037
        // Predicated region
        $region69: #{tpu_custom_call.1} parent=39 // pred_check
          %p1039 = pneg %p204
        $region70: #{tpu_custom_call.1} parent=39 // pred_check_branch
          %1041 = sbr.rel (%p1039) target = $region72
        $region71: #{tpu_custom_call.1} parent=39 // pred_region
          %s1043 = ssub.s32 128, 128
          %1044 = vsyncadd [#allocation6], %s1043
          %s1045 = smul.addr %s31, 128
          %s1046 = scalar_lea.hbm %s5, %s1045
          %s1048 = sshll.u32 [#allocation10], 4
          %s1049 = int_to_ptr.vmem [resolvable:$true] %s1048
          %1051 = dma.vmem_to_hbm [thread:$0]  %s1049, 128, %s1046, [#allocation6]
        $region72: #{tpu_custom_call.1} parent=39 // pred_fallthru
          _
        // Predicated region
        $region73: #{tpu_custom_call.1} parent=39 // pred_check
          %p1052 = pneg %p230
        $region74: #{tpu_custom_call.1} parent=39 // pred_check_branch
          %1054 = sbr.rel (%p1052) target = $region76
        $region75: #{tpu_custom_call.1} parent=39 // pred_region
          %s1056 = ssub.s32 128, 128
          %1057 = vsyncadd [#allocation12], %s1056
          %s1058 = smul.addr %s31, 128
          %s1059 = scalar_lea.hbm %s6, %s1058
          %s1061 = sshll.u32 [#allocation11], 4
          %s1062 = int_to_ptr.vmem [resolvable:$true] %s1061
          %1064 = dma.vmem_to_hbm [thread:$0]  %s1062, 128, %s1059, [#allocation12]
        $region76: #{tpu_custom_call.1} parent=39 // pred_fallthru
          _
        // Predicated region
        $region77: #{tpu_custom_call.1} parent=39 // pred_check
          %p1065 = pneg %p264
        $region78: #{tpu_custom_call.1} parent=39 // pred_check_branch
          %1067 = sbr.rel (%p1065) target = $region80
        $region79: #{tpu_custom_call.1} parent=39 // pred_region
          %s1068 = ssub.s32 %s32, 1
          %p1069 = scmp.gt.s32.totalorder %s1068, 0
          %s1070 = scalar_select %p1069, %s1068, 0
          %s1071 = smul.u32 2, %s1070
          %s1073 = ssub.s32 256, 256
          %1074 = vsyncadd %s1035, %s1073
          %s1075 = smul.addr %s31, 2
          %s1076 = sadd.s32 %s1071, %s1075
          %s1077 = smul.addr %s1076, 128
          %s1078 = scalar_lea.hbm %s7, %s1077
          %s1080 = sshll.u32 %s1038, 4
          %s1081 = int_to_ptr.vmem [resolvable:$true] %s1080
          %1083 = dma.vmem_to_hbm [thread:$0]  %s1081, 256, %s1078, %s1035
        $region80: #{tpu_custom_call.1} parent=39 // pred_fallthru
          _
        // Predicated region
        $region81: #{tpu_custom_call.1} parent=39 // pred_check
          %p1084 = pneg %p204
        $region82: #{tpu_custom_call.1} parent=39 // pred_check_branch
          %1086 = sbr.rel (%p1084) target = $region84
        $region83: #{tpu_custom_call.1} parent=39 // pred_region
          %1087 = dma.done [#allocation6], 128
        $region84: #{tpu_custom_call.1} parent=39 // pred_fallthru
          _
        // Predicated region
        $region85: #{tpu_custom_call.1} parent=39 // pred_check
          %p1088 = pneg %p230
        $region86: #{tpu_custom_call.1} parent=39 // pred_check_branch
          %1090 = sbr.rel (%p1088) target = $region88
        $region87: #{tpu_custom_call.1} parent=39 // pred_region
          %1091 = dma.done [#allocation12], 128
        $region88: #{tpu_custom_call.1} parent=39 // pred_fallthru
          _
      $region40: #{tpu_custom_call.1} parent=5 // pred_fallthru
        _
      %p1092 = scmp.le.s32.totalorder 2, %s22
      // Predicated region
      $region89: #{tpu_custom_call.1} parent=5 // pred_check
        %p1093 = pneg %p1092
      $region90: #{tpu_custom_call.1} parent=5 // pred_check_branch
        %1095 = sbr.rel (%p1093) target = $region92
      $region91: #{tpu_custom_call.1} parent=5 // pred_region
        %s1096 = ssub.s32 %s22, 2
        // Predicated region
        $region93: #{tpu_custom_call.1} parent=91 // pred_check
          %p1097 = pneg %p270
        $region94: #{tpu_custom_call.1} parent=91 // pred_check_branch
          %1099 = sbr.rel (%p1097) target = $region96
        $region95: #{tpu_custom_call.1} parent=91 // pred_region
          %s1100 = sand.u32 %s28, 1
          %s1101 = scalar_lea.sflag [#allocation6], %s1100
          %s1102 = sand.u32 %s255, 1
          %s1103 = smul.addr %s1102, 16
          %s1104 = scalar_lea.vmem [#allocation13], %s1103
          %1105 = dma.done %s1101, 256
        $region96: #{tpu_custom_call.1} parent=91 // pred_fallthru
          _
      $region92: #{tpu_custom_call.1} parent=5 // pred_fallthru
        _
    $region6: #{tpu_custom_call.1} parent=1 // loop_footer
      %s26 = sadd.s32 1, %s22
    $region7: #{tpu_custom_call.1} parent=1 // loop_footer_branch
      %21 = sbr.rel target = $region3
    $region8: #{tpu_custom_call.1} parent=1 // loop_exit
      _
    %1106 = vsyncpa [#allocation5], 1
    %s1107 = scalar_lea.sflag [#allocation5], 1
    %1108 = vsyncpa %s1107, 1
    %1109 = vsyncpa [#allocation8], 1
    %s1110 = scalar_lea.sflag [#allocation8], 1
    %1111 = vsyncpa %s1110, 1
    %1112 = vsyncpa [#allocation6], 1
    %s1113 = scalar_lea.sflag [#allocation6], 1
    %1114 = vsyncpa %s1113, 1
    %1115 = vsyncpa [#allocation12], 1

</llo_original>
